<compile_context>
chip_gen: v5e
topology: v5e:2x2
jax: 0.10.0
libtpu: 0.0.40
codegen_flags: <defaults>
</compile_context>

<pallas_src>
import functools

import jax
import jax.numpy as jnp
from jax import lax
from jax.experimental import pallas as pl
from jax.experimental.pallas import tpu as pltpu

EPS = 1e-5  # PyTorch BatchNorm2d default eps


# ----------------------------- kernel helpers -----------------------------

def _depthwise3x3(x, w_ref, b_ref, width):
    """3x3 depthwise conv, stride 1, pad 1, in channel-major lane-dense layout.

    x     : (C, H*W)  activations (channels on sublanes, flattened spatial on lanes)
    w_ref : (C, 9)    per-channel taps, k = ky*3 + kx  (torch W[c, 0, ky, kx]), BN scale folded
    b_ref : (C, 1)    folded BN shift
    """
    C, HW = x.shape
    w = w_ref[...]                                         # (C, 9)

    col = lax.broadcasted_iota(jnp.int32, (C, HW), 1)      # flattened spatial index h*W + w
    wcol = col % width                                     # x coordinate
    left_ok = wcol > 0                                     # valid for dx = -1
    right_ok = wcol < (width - 1)                          # valid for dx = +1
    top_ok = col >= width                                  # valid for dy = -1
    bot_ok = col < (HW - width)                            # valid for dy = +1

    # Center tap initializes the accumulator together with the BN shift (no zeros+add).
    acc = b_ref[...] + x * w[:, 4:5]
    for dy in (-1, 0, 1):
        for dx in (-1, 0, 1):
            if dy == 0 and dx == 0:
                continue
            k = (dy + 1) * 3 + (dx + 1)
            # shifted[n] = x[n + dy*W + dx]  (XLU lane rotate; wrapped lanes masked to 0)
            shift = (-(dy * width + dx)) % HW
            tap = pltpu.roll(x, shift, axis=1)
            mask = None
            if dy < 0:
                mask = top_ok
            elif dy > 0:
                mask = bot_ok
            if dx < 0:
                mask = left_ok if mask is None else jnp.logical_and(mask, left_ok)
            elif dx > 0:
                mask = right_ok if mask is None else jnp.logical_and(mask, right_ok)
            tap = jnp.where(mask, tap, 0.0)
            acc = acc + tap * w[:, k:k + 1]                # per-channel (C,1) weight, lane bcast
    return acc


def _pointwise(x, wT_ref, b_ref):
    """1x1 conv as Cin per-channel VPU FMAs (no MXU).

    x      : (Cin, H*W)
    wT_ref : (Cout, Cin)  transposed pointwise weights, BN scale folded
    b_ref  : (Cout, 1)    folded BN shift
    returns (Cout, H*W)
    """
    cin = x.shape[0]
    wT = wT_ref[...]
    acc = b_ref[...] + x[0:1, :] * wT[:, 0:1]              # bias init + first channel
    for c in range(1, cin):
        acc = acc + x[c:c + 1, :] * wT[:, c:c + 1]
    return acc


# ------------------------------- the kernel --------------------------------

def block_kernel(inp_ref,
                 dw1_ref, b1_ref, pw1_ref, b2_ref,
                 dw2_ref, b3_ref, pw2_ref, b4_ref,
                 wsk_ref, bsk_ref,
                 out_ref, *, width):
    inp = inp_ref[...]                                     # (Cin, H*W)

    # ------------------ main branch (self.rep) ------------------
    x = jnp.maximum(inp, 0.0)                              # start_with_relu=True
    x = _depthwise3x3(x, dw1_ref, b1_ref, width)           # dw3x3 + BN(inplanes)
    x = _pointwise(x, pw1_ref, b2_ref)                     # 1x1   + BN(planes)
    x = jnp.maximum(x, 0.0)
    x = _depthwise3x3(x, dw2_ref, b3_ref, width)           # dw3x3 + BN(planes)
    x = _pointwise(x, pw2_ref, b4_ref)                     # 1x1   + BN(planes)

    # ------------------ skip branch: 1x1 conv + BN on raw input --------------
    skip = _pointwise(inp, wsk_ref, bsk_ref)

    out_ref[...] = x + skip


# ------------------------------- wrapper ------------------------------------

_ORDER = ["dw1", "b1", "pw1T", "b2", "dw2", "b3", "pw2T", "b4", "wskT", "bsk"]


def block_forward(x_nchw, p):
    B, Cin, H, W = x_nchw.shape
    HW = H * W
    Cout = p["pw1T"].shape[0]

    # NCHW -> channel-major (B, C, H*W): a pure reshape, no transpose needed.
    x = x_nchw.reshape(B, Cin, HW).astype(jnp.float32)

    def wspec(a):
        zeros = (0,) * a.ndim
        return pl.BlockSpec(a.shape, lambda b, z=zeros: z)

    in_specs = [pl.BlockSpec((None, Cin, HW), lambda b: (b, 0, 0))]   # squeezed batch dim
    in_specs += [wspec(p[k]) for k in _ORDER]

    out = pl.pallas_call(
        functools.partial(block_kernel, width=W),
        out_shape=jax.ShapeDtypeStruct((B, Cout, HW), jnp.float32),
        grid_spec=pltpu.PrefetchScalarGridSpec(
            num_scalar_prefetch=0,
            grid=(B,),
            in_specs=in_specs,
            out_specs=pl.BlockSpec((None, Cout, HW), lambda b: (b, 0, 0)),
        ),
        compiler_params=pltpu.CompilerParams(dimension_semantics=("parallel",)),
    )(x, *[p[k] for k in _ORDER])

    return out.reshape(B, Cout, H, W)                      # already NCHW


# --------------------------- params (synthetic) ------------------------------

def make_raw_params(key, cin, cout):
    ks = iter(jax.random.split(key, 32))

    def nrm(shape, scale=0.3):
        return scale * jax.random.normal(next(ks), shape, jnp.float32)

    def bn_raw(c):
        g = 0.5 + jax.random.uniform(next(ks), (c,), jnp.float32)
        be = 0.1 * jax.random.normal(next(ks), (c,), jnp.float32)
        m = 0.1 * jax.random.normal(next(ks), (c,), jnp.float32)
        v = 0.5 + jax.random.uniform(next(ks), (c,), jnp.float32)
        return (g, be, m, v)

    return {
        "dw1": nrm((9, cin)), "bn1": bn_raw(cin),
        "pw1": nrm((cin, cout)), "bn2": bn_raw(cout),
        "dw2": nrm((9, cout)), "bn3": bn_raw(cout),
        "pw2": nrm((cout, cout)), "bn4": bn_raw(cout),
        "wsk": nrm((cin, cout)), "bns": bn_raw(cout),
    }


def prepare_kernel_params(raw):
    """Fold eval-mode BN (scale into the preceding conv weights, shift as a bias) and
    lay weights out for the channel-major kernel."""

    def fold(gamma, beta, mean, var):
        s = gamma / jnp.sqrt(var + EPS)
        return s, beta - mean * s

    s1, b1 = fold(*raw["bn1"])
    s2, b2 = fold(*raw["bn2"])
    s3, b3 = fold(*raw["bn3"])
    s4, b4 = fold(*raw["bn4"])
    ss, bs = fold(*raw["bns"])

    return {
        "dw1": (raw["dw1"] * s1[None, :]).T,    # (Cin, 9)
        "b1": b1[:, None],                      # (Cin, 1)
        "pw1T": (raw["pw1"] * s2[None, :]).T,   # (Cout, Cin)
        "b2": b2[:, None],                      # (Cout, 1)
        "dw2": (raw["dw2"] * s3[None, :]).T,    # (Cout, 9)
        "b3": b3[:, None],
        "pw2T": (raw["pw2"] * s4[None, :]).T,   # (Cout, Cout)
        "b4": b4[:, None],
        "wskT": (raw["wsk"] * ss[None, :]).T,   # (Cout, Cin)
        "bsk": bs[:, None],
    }


# --------------------------- plain-JAX reference -----------------------------

def ref_block_nchw(x_nchw, raw):
    x = jnp.transpose(x_nchw, (0, 2, 3, 1)).astype(jnp.float32)

    def bn(t, g, be, m, v):
        return (t - m) / jnp.sqrt(v + EPS) * g + be

    def dwconv(t, dw):
        c = t.shape[-1]
        w = dw.reshape(3, 3, 1, c)            # HWIO, depthwise
        return lax.conv_general_dilated(
            t, w, window_strides=(1, 1), padding=((1, 1), (1, 1)),
            dimension_numbers=("NHWC", "HWIO", "NHWC"),
            feature_group_count=c)

    def pwconv(t, w):
        return jnp.einsum("bhwc,cd->bhwd", t, w)

    y = jax.nn.relu(x)
    y = dwconv(y, raw["dw1"]); y = bn(y, *raw["bn1"])
    y = pwconv(y, raw["pw1"]); y = bn(y, *raw["bn2"])
    y = jax.nn.relu(y)
    y = dwconv(y, raw["dw2"]); y = bn(y, *raw["bn3"])
    y = pwconv(y, raw["pw2"]); y = bn(y, *raw["bn4"])
    skip = pwconv(x, raw["wsk"]); skip = bn(skip, *raw["bns"])
    return jnp.transpose(y + skip, (0, 3, 1, 2))


# ---------------------------------- main -------------------------------------

if __name__ == "__main__":
    B, Cin, H, W = 2, 4, 16, 16
    Cout = 8

    key = jax.random.PRNGKey(0)
    kx, kp = jax.random.split(key)
    x = jax.random.normal(kx, (B, Cin, H, W), jnp.float32)   # NCHW, like the PyTorch module
    raw = make_raw_params(kp, Cin, Cout)
    params = prepare_kernel_params(raw)

    out = block_forward(x, params)
    out = jax.block_until_ready(out)

    ref = ref_block_nchw(x, raw)
    assert out.shape == (B, Cout, H, W), out.shape
    err = float(jnp.max(jnp.abs(out - ref)))
    assert jnp.allclose(out, ref, atol=2e-3, rtol=2e-3), f"max abs err = {err}"

    print("KERNEL_OK")
</pallas_src>

<mosaic_0001>
module attributes {stable_mosaic.version = 11 : i64} {
  func.func @block_kernel(%arg0: i32, %arg1: memref<1x4x256xf32, #tpu.memory_space<vmem>>, %arg2: memref<4x9xf32, #tpu.memory_space<vmem>>, %arg3: memref<4x1xf32, #tpu.memory_space<vmem>>, %arg4: memref<8x4xf32, #tpu.memory_space<vmem>>, %arg5: memref<8x1xf32, #tpu.memory_space<vmem>>, %arg6: memref<8x9xf32, #tpu.memory_space<vmem>>, %arg7: memref<8x1xf32, #tpu.memory_space<vmem>>, %arg8: memref<8x8xf32, #tpu.memory_space<vmem>>, %arg9: memref<8x1xf32, #tpu.memory_space<vmem>>, %arg10: memref<8x4xf32, #tpu.memory_space<vmem>>, %arg11: memref<8x1xf32, #tpu.memory_space<vmem>>, %arg12: memref<1x8x256xf32, #tpu.memory_space<vmem>>) attributes {dimension_semantics = [#tpu.dimension_semantics<parallel>], iteration_bounds = array<i64: 2>, scalar_prefetch = 0 : i64, scratch_operands = 0 : i64, tpu.core_type = #tpu.core_type<tc>, window_params = [{transform_indices = @transform_0, window_bounds = array<i64: 1, 4, 256>}, {pipeline_mode = #tpu.pipeline_mode<synchronous>, transform_indices = @transform_1, window_bounds = array<i64: 4, 9>}, {pipeline_mode = #tpu.pipeline_mode<synchronous>, transform_indices = @transform_2, window_bounds = array<i64: 4, 1>}, {pipeline_mode = #tpu.pipeline_mode<synchronous>, transform_indices = @transform_3, window_bounds = array<i64: 8, 4>}, {pipeline_mode = #tpu.pipeline_mode<synchronous>, transform_indices = @transform_4, window_bounds = array<i64: 8, 1>}, {pipeline_mode = #tpu.pipeline_mode<synchronous>, transform_indices = @transform_5, window_bounds = array<i64: 8, 9>}, {pipeline_mode = #tpu.pipeline_mode<synchronous>, transform_indices = @transform_6, window_bounds = array<i64: 8, 1>}, {pipeline_mode = #tpu.pipeline_mode<synchronous>, transform_indices = @transform_7, window_bounds = array<i64: 8, 8>}, {pipeline_mode = #tpu.pipeline_mode<synchronous>, transform_indices = @transform_8, window_bounds = array<i64: 8, 1>}, {pipeline_mode = #tpu.pipeline_mode<synchronous>, transform_indices = @transform_9, window_bounds = array<i64: 8, 4>}, {pipeline_mode = #tpu.pipeline_mode<synchronous>, transform_indices = @transform_10, window_bounds = array<i64: 8, 1>}, {transform_indices = @transform_11, window_bounds = array<i64: 1, 8, 256>}]} {
    %c0 = arith.constant 0 : index
    %c0_0 = arith.constant 0 : index
    %c0_1 = arith.constant 0 : index
    %0 = vector.load %arg1[%c0, %c0_0, %c0_1] : memref<1x4x256xf32, #tpu.memory_space<vmem>>, vector<1x4x256xf32>
    %1 = vector.shape_cast %0 : vector<1x4x256xf32> to vector<4x256xf32>
    %cst = arith.constant 0.000000e+00 : f32
    %2 = vector.broadcast %cst : f32 to vector<4x256xf32>
    %3 = arith.maximumf %1, %2 : vector<4x256xf32>
    %c0_2 = arith.constant 0 : index
    %c0_3 = arith.constant 0 : index
    %4 = vector.load %arg2[%c0_2, %c0_3] : memref<4x9xf32, #tpu.memory_space<vmem>>, vector<4x9xf32>
    %5 = tpu.iota {dimensions = array<i32: 1>} : vector<4x256xi32>
    %c16_i32 = arith.constant 16 : i32
    %c0_i32 = arith.constant 0 : i32
    %6 = arith.cmpi eq, %c16_i32, %c0_i32 : i32
    %c1_i32 = arith.constant 1 : i32
    %7 = arith.select %6, %c1_i32, %c16_i32 : i32
    %8 = vector.broadcast %7 : i32 to vector<4x256xi32>
    %9 = arith.remsi %5, %8 : vector<4x256xi32>
    %c0_i32_4 = arith.constant 0 : i32
    %10 = vector.broadcast %c0_i32_4 : i32 to vector<4x256xi32>
    %11 = arith.cmpi ne, %9, %10 : vector<4x256xi32>
    %c0_i32_5 = arith.constant 0 : i32
    %12 = vector.broadcast %c0_i32_5 : i32 to vector<4x256xi32>
    %13 = arith.cmpi slt, %9, %12 : vector<4x256xi32>
    %c0_i32_6 = arith.constant 0 : i32
    %14 = arith.cmpi slt, %7, %c0_i32_6 : i32
    %15 = vector.broadcast %14 : i1 to vector<4x256xi1>
    %16 = vector.broadcast %15 : vector<4x256xi1> to vector<4x256xi1>
    %17 = arith.xori %13, %16 : vector<4x256xi1>
    %18 = arith.andi %17, %11 : vector<4x256xi1>
    %19 = vector.broadcast %7 : i32 to vector<4x256xi32>
    %20 = arith.addi %9, %19 : vector<4x256xi32>
    %21 = arith.select %18, %20, %9 : vector<4x256xi1>, vector<4x256xi32>
    %c0_i32_7 = arith.constant 0 : i32
    %22 = vector.broadcast %c0_i32_7 : i32 to vector<4x256xi32>
    %23 = arith.cmpi sgt, %21, %22 : vector<4x256xi32>
    %c15_i32 = arith.constant 15 : i32
    %24 = vector.broadcast %c15_i32 : i32 to vector<4x256xi32>
    %25 = arith.cmpi slt, %21, %24 : vector<4x256xi32>
    %c16_i32_8 = arith.constant 16 : i32
    %26 = vector.broadcast %c16_i32_8 : i32 to vector<4x256xi32>
    %27 = arith.cmpi sge, %5, %26 : vector<4x256xi32>
    %c240_i32 = arith.constant 240 : i32
    %28 = vector.broadcast %c240_i32 : i32 to vector<4x256xi32>
    %29 = arith.cmpi slt, %5, %28 : vector<4x256xi32>
    %c0_9 = arith.constant 0 : index
    %c0_10 = arith.constant 0 : index
    %30 = vector.load %arg3[%c0_9, %c0_10] : memref<4x1xf32, #tpu.memory_space<vmem>>, vector<4x1xf32>
    %31 = vector.extract_strided_slice %4 {offsets = [0, 4], sizes = [4, 1], strides = [1, 1]} : vector<4x9xf32> to vector<4x1xf32>
    %32 = vector.broadcast %31 : vector<4x1xf32> to vector<4x256xf32>
    %33 = arith.mulf %3, %32 : vector<4x256xf32>
    %34 = vector.broadcast %30 : vector<4x1xf32> to vector<4x256xf32>
    %35 = arith.addf %34, %33 : vector<4x256xf32>
    %c17_i32 = arith.constant 17 : i32
    %36 = tpu.dynamic_rotate %3 by %c17_i32 dim 1 : vector<4x256xf32>, i32 -> vector<4x256xf32>
    %37 = arith.andi %27, %23 : vector<4x256xi1>
    %cst_11 = arith.constant 0.000000e+00 : f32
    %38 = vector.broadcast %cst_11 : f32 to vector<4x256xf32>
    %39 = arith.select %37, %36, %38 : vector<4x256xi1>, vector<4x256xf32>
    %40 = vector.extract_strided_slice %4 {offsets = [0, 0], sizes = [4, 1], strides = [1, 1]} : vector<4x9xf32> to vector<4x1xf32>
    %41 = vector.broadcast %40 : vector<4x1xf32> to vector<4x256xf32>
    %42 = arith.mulf %39, %41 : vector<4x256xf32>
    %43 = arith.addf %35, %42 : vector<4x256xf32>
    %c16_i32_12 = arith.constant 16 : i32
    %44 = tpu.dynamic_rotate %3 by %c16_i32_12 dim 1 : vector<4x256xf32>, i32 -> vector<4x256xf32>
    %cst_13 = arith.constant 0.000000e+00 : f32
    %45 = vector.broadcast %cst_13 : f32 to vector<4x256xf32>
    %46 = arith.select %27, %44, %45 : vector<4x256xi1>, vector<4x256xf32>
    %47 = vector.extract_strided_slice %4 {offsets = [0, 1], sizes = [4, 1], strides = [1, 1]} : vector<4x9xf32> to vector<4x1xf32>
    %48 = vector.broadcast %47 : vector<4x1xf32> to vector<4x256xf32>
    %49 = arith.mulf %46, %48 : vector<4x256xf32>
    %50 = arith.addf %43, %49 : vector<4x256xf32>
    %c15_i32_14 = arith.constant 15 : i32
    %51 = tpu.dynamic_rotate %3 by %c15_i32_14 dim 1 : vector<4x256xf32>, i32 -> vector<4x256xf32>
    %52 = arith.andi %27, %25 : vector<4x256xi1>
    %cst_15 = arith.constant 0.000000e+00 : f32
    %53 = vector.broadcast %cst_15 : f32 to vector<4x256xf32>
    %54 = arith.select %52, %51, %53 : vector<4x256xi1>, vector<4x256xf32>
    %55 = vector.extract_strided_slice %4 {offsets = [0, 2], sizes = [4, 1], strides = [1, 1]} : vector<4x9xf32> to vector<4x1xf32>
    %56 = vector.broadcast %55 : vector<4x1xf32> to vector<4x256xf32>
    %57 = arith.mulf %54, %56 : vector<4x256xf32>
    %58 = arith.addf %50, %57 : vector<4x256xf32>
    %c1_i32_16 = arith.constant 1 : i32
    %59 = tpu.dynamic_rotate %3 by %c1_i32_16 dim 1 : vector<4x256xf32>, i32 -> vector<4x256xf32>
    %cst_17 = arith.constant 0.000000e+00 : f32
    %60 = vector.broadcast %cst_17 : f32 to vector<4x256xf32>
    %61 = arith.select %23, %59, %60 : vector<4x256xi1>, vector<4x256xf32>
    %62 = vector.extract_strided_slice %4 {offsets = [0, 3], sizes = [4, 1], strides = [1, 1]} : vector<4x9xf32> to vector<4x1xf32>
    %63 = vector.broadcast %62 : vector<4x1xf32> to vector<4x256xf32>
    %64 = arith.mulf %61, %63 : vector<4x256xf32>
    %65 = arith.addf %58, %64 : vector<4x256xf32>
    %c255_i32 = arith.constant 255 : i32
    %66 = tpu.dynamic_rotate %3 by %c255_i32 dim 1 : vector<4x256xf32>, i32 -> vector<4x256xf32>
    %cst_18 = arith.constant 0.000000e+00 : f32
    %67 = vector.broadcast %cst_18 : f32 to vector<4x256xf32>
    %68 = arith.select %25, %66, %67 : vector<4x256xi1>, vector<4x256xf32>
    %69 = vector.extract_strided_slice %4 {offsets = [0, 5], sizes = [4, 1], strides = [1, 1]} : vector<4x9xf32> to vector<4x1xf32>
    %70 = vector.broadcast %69 : vector<4x1xf32> to vector<4x256xf32>
    %71 = arith.mulf %68, %70 : vector<4x256xf32>
    %72 = arith.addf %65, %71 : vector<4x256xf32>
    %c241_i32 = arith.constant 241 : i32
    %73 = tpu.dynamic_rotate %3 by %c241_i32 dim 1 : vector<4x256xf32>, i32 -> vector<4x256xf32>
    %74 = arith.andi %29, %23 : vector<4x256xi1>
    %cst_19 = arith.constant 0.000000e+00 : f32
    %75 = vector.broadcast %cst_19 : f32 to vector<4x256xf32>
    %76 = arith.select %74, %73, %75 : vector<4x256xi1>, vector<4x256xf32>
    %77 = vector.extract_strided_slice %4 {offsets = [0, 6], sizes = [4, 1], strides = [1, 1]} : vector<4x9xf32> to vector<4x1xf32>
    %78 = vector.broadcast %77 : vector<4x1xf32> to vector<4x256xf32>
    %79 = arith.mulf %76, %78 : vector<4x256xf32>
    %80 = arith.addf %72, %79 : vector<4x256xf32>
    %c240_i32_20 = arith.constant 240 : i32
    %81 = tpu.dynamic_rotate %3 by %c240_i32_20 dim 1 : vector<4x256xf32>, i32 -> vector<4x256xf32>
    %cst_21 = arith.constant 0.000000e+00 : f32
    %82 = vector.broadcast %cst_21 : f32 to vector<4x256xf32>
    %83 = arith.select %29, %81, %82 : vector<4x256xi1>, vector<4x256xf32>
    %84 = vector.extract_strided_slice %4 {offsets = [0, 7], sizes = [4, 1], strides = [1, 1]} : vector<4x9xf32> to vector<4x1xf32>
    %85 = vector.broadcast %84 : vector<4x1xf32> to vector<4x256xf32>
    %86 = arith.mulf %83, %85 : vector<4x256xf32>
    %87 = arith.addf %80, %86 : vector<4x256xf32>
    %c239_i32 = arith.constant 239 : i32
    %88 = tpu.dynamic_rotate %3 by %c239_i32 dim 1 : vector<4x256xf32>, i32 -> vector<4x256xf32>
    %89 = arith.andi %29, %25 : vector<4x256xi1>
    %cst_22 = arith.constant 0.000000e+00 : f32
    %90 = vector.broadcast %cst_22 : f32 to vector<4x256xf32>
    %91 = arith.select %89, %88, %90 : vector<4x256xi1>, vector<4x256xf32>
    %92 = vector.extract_strided_slice %4 {offsets = [0, 8], sizes = [4, 1], strides = [1, 1]} : vector<4x9xf32> to vector<4x1xf32>
    %93 = vector.broadcast %92 : vector<4x1xf32> to vector<4x256xf32>
    %94 = arith.mulf %91, %93 : vector<4x256xf32>
    %95 = arith.addf %87, %94 : vector<4x256xf32>
    %c0_23 = arith.constant 0 : index
    %c0_24 = arith.constant 0 : index
    %96 = vector.load %arg4[%c0_23, %c0_24] : memref<8x4xf32, #tpu.memory_space<vmem>>, vector<8x4xf32>
    %c0_25 = arith.constant 0 : index
    %c0_26 = arith.constant 0 : index
    %97 = vector.load %arg5[%c0_25, %c0_26] : memref<8x1xf32, #tpu.memory_space<vmem>>, vector<8x1xf32>
    %98 = vector.extract_strided_slice %95 {offsets = [0, 0], sizes = [1, 256], strides = [1, 1]} : vector<4x256xf32> to vector<1x256xf32>
    %99 = vector.extract_strided_slice %96 {offsets = [0, 0], sizes = [8, 1], strides = [1, 1]} : vector<8x4xf32> to vector<8x1xf32>
    %100 = vector.broadcast %98 : vector<1x256xf32> to vector<8x256xf32>
    %101 = vector.broadcast %99 : vector<8x1xf32> to vector<8x256xf32>
    %102 = arith.mulf %100, %101 : vector<8x256xf32>
    %103 = vector.broadcast %97 : vector<8x1xf32> to vector<8x256xf32>
    %104 = arith.addf %103, %102 : vector<8x256xf32>
    %105 = vector.extract_strided_slice %95 {offsets = [1, 0], sizes = [1, 256], strides = [1, 1]} : vector<4x256xf32> to vector<1x256xf32>
    %106 = vector.extract_strided_slice %96 {offsets = [0, 1], sizes = [8, 1], strides = [1, 1]} : vector<8x4xf32> to vector<8x1xf32>
    %107 = vector.broadcast %105 : vector<1x256xf32> to vector<8x256xf32>
    %108 = vector.broadcast %106 : vector<8x1xf32> to vector<8x256xf32>
    %109 = arith.mulf %107, %108 : vector<8x256xf32>
    %110 = arith.addf %104, %109 : vector<8x256xf32>
    %111 = vector.extract_strided_slice %95 {offsets = [2, 0], sizes = [1, 256], strides = [1, 1]} : vector<4x256xf32> to vector<1x256xf32>
    %112 = vector.extract_strided_slice %96 {offsets = [0, 2], sizes = [8, 1], strides = [1, 1]} : vector<8x4xf32> to vector<8x1xf32>
    %113 = vector.broadcast %111 : vector<1x256xf32> to vector<8x256xf32>
    %114 = vector.broadcast %112 : vector<8x1xf32> to vector<8x256xf32>
    %115 = arith.mulf %113, %114 : vector<8x256xf32>
    %116 = arith.addf %110, %115 : vector<8x256xf32>
    %117 = vector.extract_strided_slice %95 {offsets = [3, 0], sizes = [1, 256], strides = [1, 1]} : vector<4x256xf32> to vector<1x256xf32>
    %118 = vector.extract_strided_slice %96 {offsets = [0, 3], sizes = [8, 1], strides = [1, 1]} : vector<8x4xf32> to vector<8x1xf32>
    %119 = vector.broadcast %117 : vector<1x256xf32> to vector<8x256xf32>
    %120 = vector.broadcast %118 : vector<8x1xf32> to vector<8x256xf32>
    %121 = arith.mulf %119, %120 : vector<8x256xf32>
    %122 = arith.addf %116, %121 : vector<8x256xf32>
    %cst_27 = arith.constant 0.000000e+00 : f32
    %123 = vector.broadcast %cst_27 : f32 to vector<8x256xf32>
    %124 = arith.maximumf %122, %123 : vector<8x256xf32>
    %c0_28 = arith.constant 0 : index
    %c0_29 = arith.constant 0 : index
    %125 = vector.load %arg6[%c0_28, %c0_29] : memref<8x9xf32, #tpu.memory_space<vmem>>, vector<8x9xf32>
    %126 = tpu.iota {dimensions = array<i32: 1>} : vector<8x256xi32>
    %c16_i32_30 = arith.constant 16 : i32
    %c0_i32_31 = arith.constant 0 : i32
    %127 = arith.cmpi eq, %c16_i32_30, %c0_i32_31 : i32
    %c1_i32_32 = arith.constant 1 : i32
    %128 = arith.select %127, %c1_i32_32, %c16_i32_30 : i32
    %129 = vector.broadcast %128 : i32 to vector<8x256xi32>
    %130 = arith.remsi %126, %129 : vector<8x256xi32>
    %c0_i32_33 = arith.constant 0 : i32
    %131 = vector.broadcast %c0_i32_33 : i32 to vector<8x256xi32>
    %132 = arith.cmpi ne, %130, %131 : vector<8x256xi32>
    %c0_i32_34 = arith.constant 0 : i32
    %133 = vector.broadcast %c0_i32_34 : i32 to vector<8x256xi32>
    %134 = arith.cmpi slt, %130, %133 : vector<8x256xi32>
    %c0_i32_35 = arith.constant 0 : i32
    %135 = arith.cmpi slt, %128, %c0_i32_35 : i32
    %136 = vector.broadcast %135 : i1 to vector<8x256xi1>
    %137 = vector.broadcast %136 : vector<8x256xi1> to vector<8x256xi1>
    %138 = arith.xori %134, %137 : vector<8x256xi1>
    %139 = arith.andi %138, %132 : vector<8x256xi1>
    %140 = vector.broadcast %128 : i32 to vector<8x256xi32>
    %141 = arith.addi %130, %140 : vector<8x256xi32>
    %142 = arith.select %139, %141, %130 : vector<8x256xi1>, vector<8x256xi32>
    %c0_i32_36 = arith.constant 0 : i32
    %143 = vector.broadcast %c0_i32_36 : i32 to vector<8x256xi32>
    %144 = arith.cmpi sgt, %142, %143 : vector<8x256xi32>
    %c15_i32_37 = arith.constant 15 : i32
    %145 = vector.broadcast %c15_i32_37 : i32 to vector<8x256xi32>
    %146 = arith.cmpi slt, %142, %145 : vector<8x256xi32>
    %c16_i32_38 = arith.constant 16 : i32
    %147 = vector.broadcast %c16_i32_38 : i32 to vector<8x256xi32>
    %148 = arith.cmpi sge, %126, %147 : vector<8x256xi32>
    %c240_i32_39 = arith.constant 240 : i32
    %149 = vector.broadcast %c240_i32_39 : i32 to vector<8x256xi32>
    %150 = arith.cmpi slt, %126, %149 : vector<8x256xi32>
    %c0_40 = arith.constant 0 : index
    %c0_41 = arith.constant 0 : index
    %151 = vector.load %arg7[%c0_40, %c0_41] : memref<8x1xf32, #tpu.memory_space<vmem>>, vector<8x1xf32>
    %152 = vector.extract_strided_slice %125 {offsets = [0, 4], sizes = [8, 1], strides = [1, 1]} : vector<8x9xf32> to vector<8x1xf32>
    %153 = vector.broadcast %152 : vector<8x1xf32> to vector<8x256xf32>
    %154 = arith.mulf %124, %153 : vector<8x256xf32>
    %155 = vector.broadcast %151 : vector<8x1xf32> to vector<8x256xf32>
    %156 = arith.addf %155, %154 : vector<8x256xf32>
    %c17_i32_42 = arith.constant 17 : i32
    %157 = tpu.dynamic_rotate %124 by %c17_i32_42 dim 1 : vector<8x256xf32>, i32 -> vector<8x256xf32>
    %158 = arith.andi %148, %144 : vector<8x256xi1>
    %cst_43 = arith.constant 0.000000e+00 : f32
    %159 = vector.broadcast %cst_43 : f32 to vector<8x256xf32>
    %160 = arith.select %158, %157, %159 : vector<8x256xi1>, vector<8x256xf32>
    %161 = vector.extract_strided_slice %125 {offsets = [0, 0], sizes = [8, 1], strides = [1, 1]} : vector<8x9xf32> to vector<8x1xf32>
    %162 = vector.broadcast %161 : vector<8x1xf32> to vector<8x256xf32>
    %163 = arith.mulf %160, %162 : vector<8x256xf32>
    %164 = arith.addf %156, %163 : vector<8x256xf32>
    %c16_i32_44 = arith.constant 16 : i32
    %165 = tpu.dynamic_rotate %124 by %c16_i32_44 dim 1 : vector<8x256xf32>, i32 -> vector<8x256xf32>
    %cst_45 = arith.constant 0.000000e+00 : f32
    %166 = vector.broadcast %cst_45 : f32 to vector<8x256xf32>
    %167 = arith.select %148, %165, %166 : vector<8x256xi1>, vector<8x256xf32>
    %168 = vector.extract_strided_slice %125 {offsets = [0, 1], sizes = [8, 1], strides = [1, 1]} : vector<8x9xf32> to vector<8x1xf32>
    %169 = vector.broadcast %168 : vector<8x1xf32> to vector<8x256xf32>
    %170 = arith.mulf %167, %169 : vector<8x256xf32>
    %171 = arith.addf %164, %170 : vector<8x256xf32>
    %c15_i32_46 = arith.constant 15 : i32
    %172 = tpu.dynamic_rotate %124 by %c15_i32_46 dim 1 : vector<8x256xf32>, i32 -> vector<8x256xf32>
    %173 = arith.andi %148, %146 : vector<8x256xi1>
    %cst_47 = arith.constant 0.000000e+00 : f32
    %174 = vector.broadcast %cst_47 : f32 to vector<8x256xf32>
    %175 = arith.select %173, %172, %174 : vector<8x256xi1>, vector<8x256xf32>
    %176 = vector.extract_strided_slice %125 {offsets = [0, 2], sizes = [8, 1], strides = [1, 1]} : vector<8x9xf32> to vector<8x1xf32>
    %177 = vector.broadcast %176 : vector<8x1xf32> to vector<8x256xf32>
    %178 = arith.mulf %175, %177 : vector<8x256xf32>
    %179 = arith.addf %171, %178 : vector<8x256xf32>
    %c1_i32_48 = arith.constant 1 : i32
    %180 = tpu.dynamic_rotate %124 by %c1_i32_48 dim 1 : vector<8x256xf32>, i32 -> vector<8x256xf32>
    %cst_49 = arith.constant 0.000000e+00 : f32
    %181 = vector.broadcast %cst_49 : f32 to vector<8x256xf32>
    %182 = arith.select %144, %180, %181 : vector<8x256xi1>, vector<8x256xf32>
    %183 = vector.extract_strided_slice %125 {offsets = [0, 3], sizes = [8, 1], strides = [1, 1]} : vector<8x9xf32> to vector<8x1xf32>
    %184 = vector.broadcast %183 : vector<8x1xf32> to vector<8x256xf32>
    %185 = arith.mulf %182, %184 : vector<8x256xf32>
    %186 = arith.addf %179, %185 : vector<8x256xf32>
    %c255_i32_50 = arith.constant 255 : i32
    %187 = tpu.dynamic_rotate %124 by %c255_i32_50 dim 1 : vector<8x256xf32>, i32 -> vector<8x256xf32>
    %cst_51 = arith.constant 0.000000e+00 : f32
    %188 = vector.broadcast %cst_51 : f32 to vector<8x256xf32>
    %189 = arith.select %146, %187, %188 : vector<8x256xi1>, vector<8x256xf32>
    %190 = vector.extract_strided_slice %125 {offsets = [0, 5], sizes = [8, 1], strides = [1, 1]} : vector<8x9xf32> to vector<8x1xf32>
    %191 = vector.broadcast %190 : vector<8x1xf32> to vector<8x256xf32>
    %192 = arith.mulf %189, %191 : vector<8x256xf32>
    %193 = arith.addf %186, %192 : vector<8x256xf32>
    %c241_i32_52 = arith.constant 241 : i32
    %194 = tpu.dynamic_rotate %124 by %c241_i32_52 dim 1 : vector<8x256xf32>, i32 -> vector<8x256xf32>
    %195 = arith.andi %150, %144 : vector<8x256xi1>
    %cst_53 = arith.constant 0.000000e+00 : f32
    %196 = vector.broadcast %cst_53 : f32 to vector<8x256xf32>
    %197 = arith.select %195, %194, %196 : vector<8x256xi1>, vector<8x256xf32>
    %198 = vector.extract_strided_slice %125 {offsets = [0, 6], sizes = [8, 1], strides = [1, 1]} : vector<8x9xf32> to vector<8x1xf32>
    %199 = vector.broadcast %198 : vector<8x1xf32> to vector<8x256xf32>
    %200 = arith.mulf %197, %199 : vector<8x256xf32>
    %201 = arith.addf %193, %200 : vector<8x256xf32>
    %c240_i32_54 = arith.constant 240 : i32
    %202 = tpu.dynamic_rotate %124 by %c240_i32_54 dim 1 : vector<8x256xf32>, i32 -> vector<8x256xf32>
    %cst_55 = arith.constant 0.000000e+00 : f32
    %203 = vector.broadcast %cst_55 : f32 to vector<8x256xf32>
    %204 = arith.select %150, %202, %203 : vector<8x256xi1>, vector<8x256xf32>
    %205 = vector.extract_strided_slice %125 {offsets = [0, 7], sizes = [8, 1], strides = [1, 1]} : vector<8x9xf32> to vector<8x1xf32>
    %206 = vector.broadcast %205 : vector<8x1xf32> to vector<8x256xf32>
    %207 = arith.mulf %204, %206 : vector<8x256xf32>
    %208 = arith.addf %201, %207 : vector<8x256xf32>
    %c239_i32_56 = arith.constant 239 : i32
    %209 = tpu.dynamic_rotate %124 by %c239_i32_56 dim 1 : vector<8x256xf32>, i32 -> vector<8x256xf32>
    %210 = arith.andi %150, %146 : vector<8x256xi1>
    %cst_57 = arith.constant 0.000000e+00 : f32
    %211 = vector.broadcast %cst_57 : f32 to vector<8x256xf32>
    %212 = arith.select %210, %209, %211 : vector<8x256xi1>, vector<8x256xf32>
    %213 = vector.extract_strided_slice %125 {offsets = [0, 8], sizes = [8, 1], strides = [1, 1]} : vector<8x9xf32> to vector<8x1xf32>
    %214 = vector.broadcast %213 : vector<8x1xf32> to vector<8x256xf32>
    %215 = arith.mulf %212, %214 : vector<8x256xf32>
    %216 = arith.addf %208, %215 : vector<8x256xf32>
    %c0_58 = arith.constant 0 : index
    %c0_59 = arith.constant 0 : index
    %217 = vector.load %arg8[%c0_58, %c0_59] : memref<8x8xf32, #tpu.memory_space<vmem>>, vector<8x8xf32>
    %c0_60 = arith.constant 0 : index
    %c0_61 = arith.constant 0 : index
    %218 = vector.load %arg9[%c0_60, %c0_61] : memref<8x1xf32, #tpu.memory_space<vmem>>, vector<8x1xf32>
    %219 = vector.extract_strided_slice %216 {offsets = [0, 0], sizes = [1, 256], strides = [1, 1]} : vector<8x256xf32> to vector<1x256xf32>
    %220 = vector.extract_strided_slice %217 {offsets = [0, 0], sizes = [8, 1], strides = [1, 1]} : vector<8x8xf32> to vector<8x1xf32>
    %221 = vector.broadcast %219 : vector<1x256xf32> to vector<8x256xf32>
    %222 = vector.broadcast %220 : vector<8x1xf32> to vector<8x256xf32>
    %223 = arith.mulf %221, %222 : vector<8x256xf32>
    %224 = vector.broadcast %218 : vector<8x1xf32> to vector<8x256xf32>
    %225 = arith.addf %224, %223 : vector<8x256xf32>
    %226 = vector.extract_strided_slice %216 {offsets = [1, 0], sizes = [1, 256], strides = [1, 1]} : vector<8x256xf32> to vector<1x256xf32>
    %227 = vector.extract_strided_slice %217 {offsets = [0, 1], sizes = [8, 1], strides = [1, 1]} : vector<8x8xf32> to vector<8x1xf32>
    %228 = vector.broadcast %226 : vector<1x256xf32> to vector<8x256xf32>
    %229 = vector.broadcast %227 : vector<8x1xf32> to vector<8x256xf32>
    %230 = arith.mulf %228, %229 : vector<8x256xf32>
    %231 = arith.addf %225, %230 : vector<8x256xf32>
    %232 = vector.extract_strided_slice %216 {offsets = [2, 0], sizes = [1, 256], strides = [1, 1]} : vector<8x256xf32> to vector<1x256xf32>
    %233 = vector.extract_strided_slice %217 {offsets = [0, 2], sizes = [8, 1], strides = [1, 1]} : vector<8x8xf32> to vector<8x1xf32>
    %234 = vector.broadcast %232 : vector<1x256xf32> to vector<8x256xf32>
    %235 = vector.broadcast %233 : vector<8x1xf32> to vector<8x256xf32>
    %236 = arith.mulf %234, %235 : vector<8x256xf32>
    %237 = arith.addf %231, %236 : vector<8x256xf32>
    %238 = vector.extract_strided_slice %216 {offsets = [3, 0], sizes = [1, 256], strides = [1, 1]} : vector<8x256xf32> to vector<1x256xf32>
    %239 = vector.extract_strided_slice %217 {offsets = [0, 3], sizes = [8, 1], strides = [1, 1]} : vector<8x8xf32> to vector<8x1xf32>
    %240 = vector.broadcast %238 : vector<1x256xf32> to vector<8x256xf32>
    %241 = vector.broadcast %239 : vector<8x1xf32> to vector<8x256xf32>
    %242 = arith.mulf %240, %241 : vector<8x256xf32>
    %243 = arith.addf %237, %242 : vector<8x256xf32>
    %244 = vector.extract_strided_slice %216 {offsets = [4, 0], sizes = [1, 256], strides = [1, 1]} : vector<8x256xf32> to vector<1x256xf32>
    %245 = vector.extract_strided_slice %217 {offsets = [0, 4], sizes = [8, 1], strides = [1, 1]} : vector<8x8xf32> to vector<8x1xf32>
    %246 = vector.broadcast %244 : vector<1x256xf32> to vector<8x256xf32>
    %247 = vector.broadcast %245 : vector<8x1xf32> to vector<8x256xf32>
    %248 = arith.mulf %246, %247 : vector<8x256xf32>
    %249 = arith.addf %243, %248 : vector<8x256xf32>
    %250 = vector.extract_strided_slice %216 {offsets = [5, 0], sizes = [1, 256], strides = [1, 1]} : vector<8x256xf32> to vector<1x256xf32>
    %251 = vector.extract_strided_slice %217 {offsets = [0, 5], sizes = [8, 1], strides = [1, 1]} : vector<8x8xf32> to vector<8x1xf32>
    %252 = vector.broadcast %250 : vector<1x256xf32> to vector<8x256xf32>
    %253 = vector.broadcast %251 : vector<8x1xf32> to vector<8x256xf32>
    %254 = arith.mulf %252, %253 : vector<8x256xf32>
    %255 = arith.addf %249, %254 : vector<8x256xf32>
    %256 = vector.extract_strided_slice %216 {offsets = [6, 0], sizes = [1, 256], strides = [1, 1]} : vector<8x256xf32> to vector<1x256xf32>
    %257 = vector.extract_strided_slice %217 {offsets = [0, 6], sizes = [8, 1], strides = [1, 1]} : vector<8x8xf32> to vector<8x1xf32>
    %258 = vector.broadcast %256 : vector<1x256xf32> to vector<8x256xf32>
    %259 = vector.broadcast %257 : vector<8x1xf32> to vector<8x256xf32>
    %260 = arith.mulf %258, %259 : vector<8x256xf32>
    %261 = arith.addf %255, %260 : vector<8x256xf32>
    %262 = vector.extract_strided_slice %216 {offsets = [7, 0], sizes = [1, 256], strides = [1, 1]} : vector<8x256xf32> to vector<1x256xf32>
    %263 = vector.extract_strided_slice %217 {offsets = [0, 7], sizes = [8, 1], strides = [1, 1]} : vector<8x8xf32> to vector<8x1xf32>
    %264 = vector.broadcast %262 : vector<1x256xf32> to vector<8x256xf32>
    %265 = vector.broadcast %263 : vector<8x1xf32> to vector<8x256xf32>
    %266 = arith.mulf %264, %265 : vector<8x256xf32>
    %267 = arith.addf %261, %266 : vector<8x256xf32>
    %c0_62 = arith.constant 0 : index
    %c0_63 = arith.constant 0 : index
    %268 = vector.load %arg10[%c0_62, %c0_63] : memref<8x4xf32, #tpu.memory_space<vmem>>, vector<8x4xf32>
    %c0_64 = arith.constant 0 : index
    %c0_65 = arith.constant 0 : index
    %269 = vector.load %arg11[%c0_64, %c0_65] : memref<8x1xf32, #tpu.memory_space<vmem>>, vector<8x1xf32>
    %270 = vector.extract_strided_slice %1 {offsets = [0, 0], sizes = [1, 256], strides = [1, 1]} : vector<4x256xf32> to vector<1x256xf32>
    %271 = vector.extract_strided_slice %268 {offsets = [0, 0], sizes = [8, 1], strides = [1, 1]} : vector<8x4xf32> to vector<8x1xf32>
    %272 = vector.broadcast %270 : vector<1x256xf32> to vector<8x256xf32>
    %273 = vector.broadcast %271 : vector<8x1xf32> to vector<8x256xf32>
    %274 = arith.mulf %272, %273 : vector<8x256xf32>
    %275 = vector.broadcast %269 : vector<8x1xf32> to vector<8x256xf32>
    %276 = arith.addf %275, %274 : vector<8x256xf32>
    %277 = vector.extract_strided_slice %1 {offsets = [1, 0], sizes = [1, 256], strides = [1, 1]} : vector<4x256xf32> to vector<1x256xf32>
    %278 = vector.extract_strided_slice %268 {offsets = [0, 1], sizes = [8, 1], strides = [1, 1]} : vector<8x4xf32> to vector<8x1xf32>
    %279 = vector.broadcast %277 : vector<1x256xf32> to vector<8x256xf32>
    %280 = vector.broadcast %278 : vector<8x1xf32> to vector<8x256xf32>
    %281 = arith.mulf %279, %280 : vector<8x256xf32>
    %282 = arith.addf %276, %281 : vector<8x256xf32>
    %283 = vector.extract_strided_slice %1 {offsets = [2, 0], sizes = [1, 256], strides = [1, 1]} : vector<4x256xf32> to vector<1x256xf32>
    %284 = vector.extract_strided_slice %268 {offsets = [0, 2], sizes = [8, 1], strides = [1, 1]} : vector<8x4xf32> to vector<8x1xf32>
    %285 = vector.broadcast %283 : vector<1x256xf32> to vector<8x256xf32>
    %286 = vector.broadcast %284 : vector<8x1xf32> to vector<8x256xf32>
    %287 = arith.mulf %285, %286 : vector<8x256xf32>
    %288 = arith.addf %282, %287 : vector<8x256xf32>
    %289 = vector.extract_strided_slice %1 {offsets = [3, 0], sizes = [1, 256], strides = [1, 1]} : vector<4x256xf32> to vector<1x256xf32>
    %290 = vector.extract_strided_slice %268 {offsets = [0, 3], sizes = [8, 1], strides = [1, 1]} : vector<8x4xf32> to vector<8x1xf32>
    %291 = vector.broadcast %289 : vector<1x256xf32> to vector<8x256xf32>
    %292 = vector.broadcast %290 : vector<8x1xf32> to vector<8x256xf32>
    %293 = arith.mulf %291, %292 : vector<8x256xf32>
    %294 = arith.addf %288, %293 : vector<8x256xf32>
    %295 = arith.addf %267, %294 : vector<8x256xf32>
    %c0_66 = arith.constant 0 : index
    %c0_67 = arith.constant 0 : index
    %c0_68 = arith.constant 0 : index
    %296 = vector.load %arg12[%c0_66, %c0_67, %c0_68] : memref<1x8x256xf32, #tpu.memory_space<vmem>>, vector<1x8x256xf32>
    %297 = vector.shape_cast %296 : vector<1x8x256xf32> to vector<8x256xf32>
    %298 = vector.shape_cast %295 : vector<8x256xf32> to vector<1x8x256xf32>
    tpu.vector_store %arg12[%c0_66, %c0_67, %c0_68], %298 {strides = array<i32>} : memref<1x8x256xf32, #tpu.memory_space<vmem>>, vector<1x8x256xf32>,
    return
  }
  func.func @transform_0(%arg0: i32) -> (i32, i32, i32) {
    %c0_i32 = arith.constant 0 : i32
    %c0_i32_0 = arith.constant 0 : i32
    %c0_i32_1 = arith.constant 0 : i32
    return %arg0, %c0_i32, %c0_i32_0 : i32, i32, i32
  }
  func.func @transform_1(%arg0: i32) -> (i32, i32) {
    %c0_i32 = arith.constant 0 : i32
    %c0_i32_0 = arith.constant 0 : i32
    %c0_i32_1 = arith.constant 0 : i32
    return %c0_i32, %c0_i32_0 : i32, i32
  }
  func.func @transform_2(%arg0: i32) -> (i32, i32) {
    %c0_i32 = arith.constant 0 : i32
    %c0_i32_0 = arith.constant 0 : i32
    %c0_i32_1 = arith.constant 0 : i32
    return %c0_i32, %c0_i32_0 : i32, i32
  }
  func.func @transform_3(%arg0: i32) -> (i32, i32) {
    %c0_i32 = arith.constant 0 : i32
    %c0_i32_0 = arith.constant 0 : i32
    %c0_i32_1 = arith.constant 0 : i32
    return %c0_i32, %c0_i32_0 : i32, i32
  }
  func.func @transform_4(%arg0: i32) -> (i32, i32) {
    %c0_i32 = arith.constant 0 : i32
    %c0_i32_0 = arith.constant 0 : i32
    %c0_i32_1 = arith.constant 0 : i32
    return %c0_i32, %c0_i32_0 : i32, i32
  }
  func.func @transform_5(%arg0: i32) -> (i32, i32) {
    %c0_i32 = arith.constant 0 : i32
    %c0_i32_0 = arith.constant 0 : i32
    %c0_i32_1 = arith.constant 0 : i32
    return %c0_i32, %c0_i32_0 : i32, i32
  }
  func.func @transform_6(%arg0: i32) -> (i32, i32) {
    %c0_i32 = arith.constant 0 : i32
    %c0_i32_0 = arith.constant 0 : i32
    %c0_i32_1 = arith.constant 0 : i32
    return %c0_i32, %c0_i32_0 : i32, i32
  }
  func.func @transform_7(%arg0: i32) -> (i32, i32) {
    %c0_i32 = arith.constant 0 : i32
    %c0_i32_0 = arith.constant 0 : i32
    %c0_i32_1 = arith.constant 0 : i32
    return %c0_i32, %c0_i32_0 : i32, i32
  }
  func.func @transform_8(%arg0: i32) -> (i32, i32) {
    %c0_i32 = arith.constant 0 : i32
    %c0_i32_0 = arith.constant 0 : i32
    %c0_i32_1 = arith.constant 0 : i32
    return %c0_i32, %c0_i32_0 : i32, i32
  }
  func.func @transform_9(%arg0: i32) -> (i32, i32) {
    %c0_i32 = arith.constant 0 : i32
    %c0_i32_0 = arith.constant 0 : i32
    %c0_i32_1 = arith.constant 0 : i32
    return %c0_i32, %c0_i32_0 : i32, i32
  }
  func.func @transform_10(%arg0: i32) -> (i32, i32) {
    %c0_i32 = arith.constant 0 : i32
    %c0_i32_0 = arith.constant 0 : i32
    %c0_i32_1 = arith.constant 0 : i32
    return %c0_i32, %c0_i32_0 : i32, i32
  }
  func.func @transform_11(%arg0: i32) -> (i32, i32, i32) {
    %c0_i32 = arith.constant 0 : i32
    %c0_i32_0 = arith.constant 0 : i32
    %c0_i32_1 = arith.constant 0 : i32
    return %arg0, %c0_i32, %c0_i32_0 : i32, i32, i32
  }
}

</mosaic_0001>

<llo_original>
// kernel: tpu_custom_call.1
$region0: #{tpu_custom_call.1}
  #allocation0 [shape = 'u32[]', space=smem, size = 0x4, offset = 0x4, fixed_abs, tag = 'smem constant byte address 0x4 - core index']
  #allocation1 [shape = 'u32[72,128]{1,0:T(1,128)}', space=vmem, size = 0x9000, scoped, tag = 'internal scratch']
  %s0 = inlined_call_operand.vmem [shape: f32[2,4,256], index: 0, kind: input, shape index: {}]
  %s1 = inlined_call_operand.vmem [shape: f32[4,9], index: 1, kind: input, shape index: {}]
  %s2 = inlined_call_operand.vmem [shape: f32[4,1], index: 2, kind: input, shape index: {}]
  %s3 = inlined_call_operand.vmem [shape: f32[8,4], index: 3, kind: input, shape index: {}]
  %s4 = inlined_call_operand.vmem [shape: f32[8,1], index: 4, kind: input, shape index: {}]
  %s5 = inlined_call_operand.vmem [shape: f32[8,9], index: 5, kind: input, shape index: {}]
  %s6 = inlined_call_operand.vmem [shape: f32[8,1], index: 6, kind: input, shape index: {}]
  %s7 = inlined_call_operand.vmem [shape: f32[8,8], index: 7, kind: input, shape index: {}]
  %s8 = inlined_call_operand.vmem [shape: f32[8,1], index: 8, kind: input, shape index: {}]
  %s9 = inlined_call_operand.vmem [shape: f32[8,4], index: 9, kind: input, shape index: {}]
  %s10 = inlined_call_operand.vmem [shape: f32[8,1], index: 10, kind: input, shape index: {}]
  %s11 = inlined_call_operand.hbm [shape: f32[2,8,256], index: 11, kind: output, shape index: {}]
  %s12 = sld [smem:[#allocation0]]
  $region77: #{tpu_custom_call.1} parent=0
    _
  %s14 = ssub.s32 1, %s12
  %s15 = scalar_select 0, %s14, %s12
  $region1: #{tpu_custom_call.1} parent=0
    #allocation2 [shape = 'u8[16384]{0}', space=vmem, size = 0x4000, scoped, tag = 'output window, operand 0']
    #allocation3 [shape = 's32[2]{0}', space=sflag, size = 0x8, scoped, tag = 'scoped memory for tpu_custom_call.1']
    %16 = vsyncpa [#allocation3], 0
    %s17 = scalar_lea.sflag [#allocation3], 1
    %18 = vsyncpa %s17, 0
    loop: start=0, step=1, limit=4
    $region2: #{tpu_custom_call.1} parent=1 // loop_pre_header
      _
    $region3: #{tpu_custom_call.1} parent=1 // loop_header
      %s20 = sphi 0, %s24
      %p21 = scmp.ge.s32.totalorder %s20, 4
      %s30 = sphi 0, %s32
      %s33 = sphi 0, %s30
      %s34 = sphi 0, %s33
      %s50 = sphi 0, %s34
      %s54 = sphi 0, %s54
      %s56 = sphi 0, %s54
      %s57 = sphi 0, %s56
      %s71 = sphi 0, %s57
      %s75 = sphi 0, %s75
      %s77 = sphi 0, %s75
      %s78 = sphi 0, %s77
      %s92 = sphi 0, %s78
      %s96 = sphi 0, %s96
      %s98 = sphi 0, %s96
      %s99 = sphi 0, %s98
      %s113 = sphi 0, %s99
      %s117 = sphi 0, %s117
      %s119 = sphi 0, %s117
      %s120 = sphi 0, %s119
      %s134 = sphi 0, %s120
      %s138 = sphi 0, %s138
      %s140 = sphi 0, %s138
      %s141 = sphi 0, %s140
      %s155 = sphi 0, %s141
      %s159 = sphi 0, %s159
      %s161 = sphi 0, %s159
      %s162 = sphi 0, %s161
      %s176 = sphi 0, %s162
      %s180 = sphi 0, %s180
      %s182 = sphi 0, %s180
      %s183 = sphi 0, %s182
      %s197 = sphi 0, %s183
      %s201 = sphi 0, %s201
      %s203 = sphi 0, %s201
      %s204 = sphi 0, %s203
      %s218 = sphi 0, %s204
      %s222 = sphi 0, %s222
      %s224 = sphi 0, %s222
      %s225 = sphi 0, %s224
      %s239 = sphi 0, %s225
      %s243 = sphi 0, %s243
      %s245 = sphi 0, %s243
      %s246 = sphi 0, %s245
      %s260 = sphi 0, %s246
      %s266 = sphi 0, %s268
      %s269 = sphi 0, %s266
      %s270 = sphi 0, %s269
      %s286 = sphi 0, %s270
    $region4: #{tpu_custom_call.1} parent=1 // loop_header_branch
      %23 = sbr.rel (%p21) target = $region8
    $region5: #{tpu_custom_call.1} parent=1 // loop_body
      %s25 = ssub.s32 %s20, 1
      %s26 = ssub.s32 %s20, 2
      %s27 = sadd.s32 %s20, 1
      %s28 = ssub.s32 %s20, %s27
      %p29 = scmp.eq.s32.totalorder %s28, 0
      %s31 = sadd.s32 %s30, 1
      %s32 = scalar_select %p29, %s30, %s31
      %p35 = pneg %p29
      %p36 = scmp.eq.s32.totalorder %s20, 1
      %p37 = por %p35, %p36
      %p38 = scmp.ne.s32.totalorder %s30, %s33
      %p39 = scmp.eq.s32.totalorder %s20, 0
      %p40 = por %p38, %p39
      %p41 = scmp.ne.s32.totalorder %s30, %s33
      %p42 = scmp.eq.s32.totalorder %s25, 1
      %p43 = por %p41, %p42
      %p44 = scmp.ne.s32.totalorder %s33, %s34
      %p45 = scmp.eq.s32.totalorder %s25, 0
      %p46 = por %p44, %p45
      %p47 = scmp.ne.s32.totalorder %s33, %s34
      %p48 = scmp.eq.s32.totalorder %s26, 1
      %p49 = por %p47, %p48
      %p51 = scmp.ne.s32.totalorder %s34, %s50
      %p52 = scmp.eq.s32.totalorder %s26, 0
      %p53 = por %p51, %p52
      %s55 = sadd.s32 %s54, 1
      %p58 = scmp.eq.s32.totalorder %s20, 1
      %p59 = scmp.ne.s32.totalorder %s54, %s56
      %p60 = scmp.eq.s32.totalorder %s20, 0
      %p61 = por %p59, %p60
      %p62 = scmp.ne.s32.totalorder %s54, %s56
      %p63 = scmp.eq.s32.totalorder %s25, 1
      %p64 = por %p62, %p63
      %p65 = scmp.ne.s32.totalorder %s56, %s57
      %p66 = scmp.eq.s32.totalorder %s25, 0
      %p67 = por %p65, %p66
      %p68 = scmp.ne.s32.totalorder %s56, %s57
      %p69 = scmp.eq.s32.totalorder %s26, 1
      %p70 = por %p68, %p69
      %p72 = scmp.ne.s32.totalorder %s57, %s71
      %p73 = scmp.eq.s32.totalorder %s26, 0
      %p74 = por %p72, %p73
      %s76 = sadd.s32 %s75, 1
      %p79 = scmp.eq.s32.totalorder %s20, 1
      %p80 = scmp.ne.s32.totalorder %s75, %s77
      %p81 = scmp.eq.s32.totalorder %s20, 0
      %p82 = por %p80, %p81
      %p83 = scmp.ne.s32.totalorder %s75, %s77
      %p84 = scmp.eq.s32.totalorder %s25, 1
      %p85 = por %p83, %p84
      %p86 = scmp.ne.s32.totalorder %s77, %s78
      %p87 = scmp.eq.s32.totalorder %s25, 0
      %p88 = por %p86, %p87
      %p89 = scmp.ne.s32.totalorder %s77, %s78
      %p90 = scmp.eq.s32.totalorder %s26, 1
      %p91 = por %p89, %p90
      %p93 = scmp.ne.s32.totalorder %s78, %s92
      %p94 = scmp.eq.s32.totalorder %s26, 0
      %p95 = por %p93, %p94
      %s97 = sadd.s32 %s96, 1
      %p100 = scmp.eq.s32.totalorder %s20, 1
      %p101 = scmp.ne.s32.totalorder %s96, %s98
      %p102 = scmp.eq.s32.totalorder %s20, 0
      %p103 = por %p101, %p102
      %p104 = scmp.ne.s32.totalorder %s96, %s98
      %p105 = scmp.eq.s32.totalorder %s25, 1
      %p106 = por %p104, %p105
      %p107 = scmp.ne.s32.totalorder %s98, %s99
      %p108 = scmp.eq.s32.totalorder %s25, 0
      %p109 = por %p107, %p108
      %p110 = scmp.ne.s32.totalorder %s98, %s99
      %p111 = scmp.eq.s32.totalorder %s26, 1
      %p112 = por %p110, %p111
      %p114 = scmp.ne.s32.totalorder %s99, %s113
      %p115 = scmp.eq.s32.totalorder %s26, 0
      %p116 = por %p114, %p115
      %s118 = sadd.s32 %s117, 1
      %p121 = scmp.eq.s32.totalorder %s20, 1
      %p122 = scmp.ne.s32.totalorder %s117, %s119
      %p123 = scmp.eq.s32.totalorder %s20, 0
      %p124 = por %p122, %p123
      %p125 = scmp.ne.s32.totalorder %s117, %s119
      %p126 = scmp.eq.s32.totalorder %s25, 1
      %p127 = por %p125, %p126
      %p128 = scmp.ne.s32.totalorder %s119, %s120
      %p129 = scmp.eq.s32.totalorder %s25, 0
      %p130 = por %p128, %p129
      %p131 = scmp.ne.s32.totalorder %s119, %s120
      %p132 = scmp.eq.s32.totalorder %s26, 1
      %p133 = por %p131, %p132
      %p135 = scmp.ne.s32.totalorder %s120, %s134
      %p136 = scmp.eq.s32.totalorder %s26, 0
      %p137 = por %p135, %p136
      %s139 = sadd.s32 %s138, 1
      %p142 = scmp.eq.s32.totalorder %s20, 1
      %p143 = scmp.ne.s32.totalorder %s138, %s140
      %p144 = scmp.eq.s32.totalorder %s20, 0
      %p145 = por %p143, %p144
      %p146 = scmp.ne.s32.totalorder %s138, %s140
      %p147 = scmp.eq.s32.totalorder %s25, 1
      %p148 = por %p146, %p147
      %p149 = scmp.ne.s32.totalorder %s140, %s141
      %p150 = scmp.eq.s32.totalorder %s25, 0
      %p151 = por %p149, %p150
      %p152 = scmp.ne.s32.totalorder %s140, %s141
      %p153 = scmp.eq.s32.totalorder %s26, 1
      %p154 = por %p152, %p153
      %p156 = scmp.ne.s32.totalorder %s141, %s155
      %p157 = scmp.eq.s32.totalorder %s26, 0
      %p158 = por %p156, %p157
      %s160 = sadd.s32 %s159, 1
      %p163 = scmp.eq.s32.totalorder %s20, 1
      %p164 = scmp.ne.s32.totalorder %s159, %s161
      %p165 = scmp.eq.s32.totalorder %s20, 0
      %p166 = por %p164, %p165
      %p167 = scmp.ne.s32.totalorder %s159, %s161
      %p168 = scmp.eq.s32.totalorder %s25, 1
      %p169 = por %p167, %p168
      %p170 = scmp.ne.s32.totalorder %s161, %s162
      %p171 = scmp.eq.s32.totalorder %s25, 0
      %p172 = por %p170, %p171
      %p173 = scmp.ne.s32.totalorder %s161, %s162
      %p174 = scmp.eq.s32.totalorder %s26, 1
      %p175 = por %p173, %p174
      %p177 = scmp.ne.s32.totalorder %s162, %s176
      %p178 = scmp.eq.s32.totalorder %s26, 0
      %p179 = por %p177, %p178
      %s181 = sadd.s32 %s180, 1
      %p184 = scmp.eq.s32.totalorder %s20, 1
      %p185 = scmp.ne.s32.totalorder %s180, %s182
      %p186 = scmp.eq.s32.totalorder %s20, 0
      %p187 = por %p185, %p186
      %p188 = scmp.ne.s32.totalorder %s180, %s182
      %p189 = scmp.eq.s32.totalorder %s25, 1
      %p190 = por %p188, %p189
      %p191 = scmp.ne.s32.totalorder %s182, %s183
      %p192 = scmp.eq.s32.totalorder %s25, 0
      %p193 = por %p191, %p192
      %p194 = scmp.ne.s32.totalorder %s182, %s183
      %p195 = scmp.eq.s32.totalorder %s26, 1
      %p196 = por %p194, %p195
      %p198 = scmp.ne.s32.totalorder %s183, %s197
      %p199 = scmp.eq.s32.totalorder %s26, 0
      %p200 = por %p198, %p199
      %s202 = sadd.s32 %s201, 1
      %p205 = scmp.eq.s32.totalorder %s20, 1
      %p206 = scmp.ne.s32.totalorder %s201, %s203
      %p207 = scmp.eq.s32.totalorder %s20, 0
      %p208 = por %p206, %p207
      %p209 = scmp.ne.s32.totalorder %s201, %s203
      %p210 = scmp.eq.s32.totalorder %s25, 1
      %p211 = por %p209, %p210
      %p212 = scmp.ne.s32.totalorder %s203, %s204
      %p213 = scmp.eq.s32.totalorder %s25, 0
      %p214 = por %p212, %p213
      %p215 = scmp.ne.s32.totalorder %s203, %s204
      %p216 = scmp.eq.s32.totalorder %s26, 1
      %p217 = por %p215, %p216
      %p219 = scmp.ne.s32.totalorder %s204, %s218
      %p220 = scmp.eq.s32.totalorder %s26, 0
      %p221 = por %p219, %p220
      %s223 = sadd.s32 %s222, 1
      %p226 = scmp.eq.s32.totalorder %s20, 1
      %p227 = scmp.ne.s32.totalorder %s222, %s224
      %p228 = scmp.eq.s32.totalorder %s20, 0
      %p229 = por %p227, %p228
      %p230 = scmp.ne.s32.totalorder %s222, %s224
      %p231 = scmp.eq.s32.totalorder %s25, 1
      %p232 = por %p230, %p231
      %p233 = scmp.ne.s32.totalorder %s224, %s225
      %p234 = scmp.eq.s32.totalorder %s25, 0
      %p235 = por %p233, %p234
      %p236 = scmp.ne.s32.totalorder %s224, %s225
      %p237 = scmp.eq.s32.totalorder %s26, 1
      %p238 = por %p236, %p237
      %p240 = scmp.ne.s32.totalorder %s225, %s239
      %p241 = scmp.eq.s32.totalorder %s26, 0
      %p242 = por %p240, %p241
      %s244 = sadd.s32 %s243, 1
      %p247 = scmp.eq.s32.totalorder %s20, 1
      %p248 = scmp.ne.s32.totalorder %s243, %s245
      %p249 = scmp.eq.s32.totalorder %s20, 0
      %p250 = por %p248, %p249
      %p251 = scmp.ne.s32.totalorder %s243, %s245
      %p252 = scmp.eq.s32.totalorder %s25, 1
      %p253 = por %p251, %p252
      %p254 = scmp.ne.s32.totalorder %s245, %s246
      %p255 = scmp.eq.s32.totalorder %s25, 0
      %p256 = por %p254, %p255
      %p257 = scmp.ne.s32.totalorder %s245, %s246
      %p258 = scmp.eq.s32.totalorder %s26, 1
      %p259 = por %p257, %p258
      %p261 = scmp.ne.s32.totalorder %s246, %s260
      %p262 = scmp.eq.s32.totalorder %s26, 0
      %p263 = por %p261, %p262
      %s264 = ssub.s32 %s20, %s27
      %p265 = scmp.eq.s32.totalorder %s264, 0
      %s267 = sadd.s32 %s266, 1
      %s268 = scalar_select %p265, %s266, %s267
      %p271 = pneg %p265
      %p272 = scmp.eq.s32.totalorder %s20, 1
      %p273 = por %p271, %p272
      %p274 = scmp.ne.s32.totalorder %s266, %s269
      %p275 = scmp.eq.s32.totalorder %s20, 0
      %p276 = por %p274, %p275
      %p277 = scmp.ne.s32.totalorder %s266, %s269
      %p278 = scmp.eq.s32.totalorder %s25, 1
      %p279 = por %p277, %p278
      %p280 = scmp.ne.s32.totalorder %s269, %s270
      %p281 = scmp.eq.s32.totalorder %s25, 0
      %p282 = por %p280, %p281
      %p283 = scmp.ne.s32.totalorder %s269, %s270
      %p284 = scmp.eq.s32.totalorder %s26, 1
      %p285 = por %p283, %p284
      %p287 = scmp.ne.s32.totalorder %s270, %s286
      %p288 = scmp.eq.s32.totalorder %s26, 0
      %p289 = por %p287, %p288
      %p290 = scmp.le.s32.totalorder 1, %s20
      %p291 = scmp.lt.s32.totalorder %s20, 3
      %p292 = pnand %p290, %p291
      %p293 = pneg %p292
      // Predicated region
      $region9: #{tpu_custom_call.1} parent=5 // pred_check
        _
      $region10: #{tpu_custom_call.1} parent=5 // pred_check_branch
        %295 = sbr.rel (%p292) target = $region12
      $region11: #{tpu_custom_call.1} parent=5 // pred_region
        %s296 = ssub.s32 %s20, 1
        // Predicated region
        $region13: #{tpu_custom_call.1} parent=11 // pred_check
          %p297 = pneg %p67
        $region14: #{tpu_custom_call.1} parent=11 // pred_check_branch
          %299 = sbr.rel (%p297) target = $region16
        $region15: #{tpu_custom_call.1} parent=11 // pred_region
          _
        $region16: #{tpu_custom_call.1} parent=11 // pred_fallthru
          _
        // Predicated region
        $region17: #{tpu_custom_call.1} parent=11 // pred_check
          %p300 = pneg %p88
        $region18: #{tpu_custom_call.1} parent=11 // pred_check_branch
          %302 = sbr.rel (%p300) target = $region20
        $region19: #{tpu_custom_call.1} parent=11 // pred_region
          _
        $region20: #{tpu_custom_call.1} parent=11 // pred_fallthru
          _
        // Predicated region
        $region21: #{tpu_custom_call.1} parent=11 // pred_check
          %p303 = pneg %p109
        $region22: #{tpu_custom_call.1} parent=11 // pred_check_branch
          %305 = sbr.rel (%p303) target = $region24
        $region23: #{tpu_custom_call.1} parent=11 // pred_region
          _
        $region24: #{tpu_custom_call.1} parent=11 // pred_fallthru
          _
        // Predicated region
        $region25: #{tpu_custom_call.1} parent=11 // pred_check
          %p306 = pneg %p130
        $region26: #{tpu_custom_call.1} parent=11 // pred_check_branch
          %308 = sbr.rel (%p306) target = $region28
        $region27: #{tpu_custom_call.1} parent=11 // pred_region
          _
        $region28: #{tpu_custom_call.1} parent=11 // pred_fallthru
          _
        // Predicated region
        $region29: #{tpu_custom_call.1} parent=11 // pred_check
          %p309 = pneg %p151
        $region30: #{tpu_custom_call.1} parent=11 // pred_check_branch
          %311 = sbr.rel (%p309) target = $region32
        $region31: #{tpu_custom_call.1} parent=11 // pred_region
          _
        $region32: #{tpu_custom_call.1} parent=11 // pred_fallthru
          _
        // Predicated region
        $region33: #{tpu_custom_call.1} parent=11 // pred_check
          %p312 = pneg %p172
        $region34: #{tpu_custom_call.1} parent=11 // pred_check_branch
          %314 = sbr.rel (%p312) target = $region36
        $region35: #{tpu_custom_call.1} parent=11 // pred_region
          _
        $region36: #{tpu_custom_call.1} parent=11 // pred_fallthru
          _
        // Predicated region
        $region37: #{tpu_custom_call.1} parent=11 // pred_check
          %p315 = pneg %p193
        $region38: #{tpu_custom_call.1} parent=11 // pred_check_branch
          %317 = sbr.rel (%p315) target = $region40
        $region39: #{tpu_custom_call.1} parent=11 // pred_region
          _
        $region40: #{tpu_custom_call.1} parent=11 // pred_fallthru
          _
        // Predicated region
        $region41: #{tpu_custom_call.1} parent=11 // pred_check
          %p318 = pneg %p214
        $region42: #{tpu_custom_call.1} parent=11 // pred_check_branch
          %320 = sbr.rel (%p318) target = $region44
        $region43: #{tpu_custom_call.1} parent=11 // pred_region
          _
        $region44: #{tpu_custom_call.1} parent=11 // pred_fallthru
          _
        // Predicated region
        $region45: #{tpu_custom_call.1} parent=11 // pred_check
          %p321 = pneg %p235
        $region46: #{tpu_custom_call.1} parent=11 // pred_check_branch
          %323 = sbr.rel (%p321) target = $region48
        $region47: #{tpu_custom_call.1} parent=11 // pred_region
          _
        $region48: #{tpu_custom_call.1} parent=11 // pred_fallthru
          _
        // Predicated region
        $region49: #{tpu_custom_call.1} parent=11 // pred_check
          %p324 = pneg %p256
        $region50: #{tpu_custom_call.1} parent=11 // pred_check_branch
          %326 = sbr.rel (%p324) target = $region52
        $region51: #{tpu_custom_call.1} parent=11 // pred_region
          _
        $region52: #{tpu_custom_call.1} parent=11 // pred_fallthru
          _
      $region12: #{tpu_custom_call.1} parent=5 // pred_fallthru
        _
      %p327 = scmp.lt.s32.totalorder %s20, 2
      // Predicated region
      $region53: #{tpu_custom_call.1} parent=5 // pred_check
        %p328 = pneg %p327
      $region54: #{tpu_custom_call.1} parent=5 // pred_check_branch
        %330 = sbr.rel (%p328) target = $region56
      $region55: #{tpu_custom_call.1} parent=5 // pred_region
        // Predicated region
        $region57: #{tpu_custom_call.1} parent=55 // pred_check
          %p331 = pneg %p40
        $region58: #{tpu_custom_call.1} parent=55 // pred_check_branch
          %333 = sbr.rel (%p331) target = $region60
        $region59: #{tpu_custom_call.1} parent=55 // pred_region
          %p334 = scmp.lt.s32.totalorder %s20, 1
          %s335 = scalar_select %p334, %s20, 1
          %s336 = smul.addr %s335, 2
          %s337 = smul.addr %s336, 4
          %s338 = scalar_lea.vmem %s0, %s337
        $region60: #{tpu_custom_call.1} parent=55 // pred_fallthru
          _
      $region56: #{tpu_custom_call.1} parent=5 // pred_fallthru
        _
      %p339 = scmp.le.s32.totalorder 1, %s20
      %p340 = scmp.lt.s32.totalorder %s20, 3
      %p341 = pnand %p339, %p340
      %p342 = pneg %p341
      // Predicated region
      $region61: #{tpu_custom_call.1} parent=5 // pred_check
        _
      $region62: #{tpu_custom_call.1} parent=5 // pred_check_branch
        %344 = sbr.rel (%p341) target = $region64
      $region63: #{tpu_custom_call.1} parent=5 // pred_region
        %s345 = ssub.s32 %s20, 1
        %p346 = scmp.lt.s32.totalorder %s25, 1
        %s347 = scalar_select %p346, %s25, 1
        %s348 = smul.addr %s347, 2
        %s349 = smul.addr %s348, 4
        %s350 = scalar_lea.vmem %s0, %s349
        %p351 = pneg %p46
        %p352 = pneg %p43
        %p353 = pneg %p67
        %p354 = pneg %p64
        %p355 = pneg %p88
        %p356 = pneg %p85
        %p357 = pneg %p109
        %p358 = pneg %p106
        %p359 = pneg %p130
        %p360 = pneg %p127
        %p361 = pneg %p151
        %p362 = pneg %p148
        %p363 = pneg %p172
        %p364 = pneg %p169
        %p365 = pneg %p193
        %p366 = pneg %p190
        %p367 = pneg %p214
        %p368 = pneg %p211
        %p369 = pneg %p235
        %p370 = pneg %p232
        %p371 = pneg %p256
        %p372 = pneg %p253
        %p373 = pneg %p282
        %p374 = pneg %p279
        %s375 = sand.u32 %s269, 1
        %s376 = scalar_lea.sflag [#allocation3], %s375
        %s377 = sand.u32 %s269, 1
        %s378 = smul.addr %s377, 16
        %s379 = scalar_lea.vmem [#allocation2], %s378
        %p380 = scmp.lt.s32.totalorder %s25, 1
        %s381 = scalar_select %p380, %s25, 1
        %s382 = smul.addr %s381, 2
        %s383 = smul.addr %s382, 4
        %s384 = scalar_lea.vmem %s0, %s383
        %v385 = vld [vmem:[%s384] sm:$0xff]
        %v386 = vmax.f32 %v385, 0.0
        %v387 = vld [vmem:[%s1] sm:$0xf]
        %v388 = vlaneseq
        %v389 = vand.u32 %v388, 127
        %v390 = vadd.s32 %v389, 128
        %vm391 = vcmp.lt.s32.totalorder %v389, 0
        %v392 = vsub.s32 0, %v389
        %v393 = vsel %vm391, %v392, %v389
        %v394 = vshrl.u32 %v393, 4
        %v395 = vand.u32 %v393, 15
        %v396 = vsub.s32 0, %v395
        %v397 = vsel %vm391, %v396, %v395
        %vm398 = vcmp.lt.s32.totalorder %v390, 0
        %v399 = vsub.s32 0, %v390
        %v400 = vsel %vm398, %v399, %v390
        %v401 = vshrl.u32 %v400, 4
        %v402 = vand.u32 %v400, 15
        %v403 = vsub.s32 0, %v402
        %v404 = vsel %vm398, %v403, %v402
        %vm405 = vcmp.ne.s32.totalorder %v397, 0
        %vm406 = vcmp.ne.s32.totalorder %v404, 0
        %vm407 = vcmp.lt.s32.totalorder %v397, 0
        %vm408 = vcmp.lt.s32.totalorder %v404, 0
        %vm409 = vmand %vm407, %vm405
        %vm410 = vmand %vm408, %vm406
        %v411 = vadd.s32 %v397, 16
        %v412 = vadd.s32 %v404, 16
        %v413 = vsel %vm409, %v411, %v397
        %v414 = vsel %vm410, %v412, %v404
        %vm415 = vcmp.gt.s32.totalorder %v413, 0
        %vm416 = vcmp.gt.s32.totalorder %v414, 0
        %vm417 = vcmp.lt.s32.totalorder %v413, 15
        %vm418 = vcmp.lt.s32.totalorder %v414, 15
        %vm419 = vcmp.ge.s32.totalorder %v389, 16
        %vm420 = vcmp.ge.s32.totalorder %v390, 16
        %vm421 = vcmp.lt.s32.totalorder %v389, 240
        %vm422 = vcmp.lt.s32.totalorder %v390, 240
        %v423 = vld [vmem:[%s2] sm:$0xf]
        %425 = vset.pattern.permute.xlu0 4
        %426 = vperm.xlu0 %425, %v387
        %v427 = vpop.permute.xlu0 %426
        %v429 = vunpack.c.l.s4 839922192
        %v430 = vunpack.c.0.s8 %v429
        %v431 = vperm.slane %v427, %v430
        %v433 = vmul.f32 %v386, %v431
        %435 = vset.pattern.permute.xlu0 0
        %436 = vperm.xlu0 %435, %v423
        %v437 = vpop.permute.xlu0 %436
        %440 = vst [vmem:[#allocation1] ss:$2 sm:$0xff] %v433
        %v441 = vld.sshfl [vmem:[#allocation1] sm:$0xff pattern:$0x75316420]
        %v442 = vld.sshfl [vmem:[#allocation1 + $0x8] sm:$0xff pattern:$0x75316420]
        %v445 = vadd.f32 %v437, %v441
        %v446 = vadd.f32 %v437, %v442
        %448 = vst [vmem:[#allocation1] ss:$2 sm:$0xff] %v386
        %v449 = vld.sshfl [vmem:[#allocation1] sm:$0xff pattern:$0x75316420]
        %v450 = vld.sshfl [vmem:[#allocation1 + $0x8] sm:$0xff pattern:$0x75316420]
        %453 = vrot.lane.b32.xlu0 %v449, 17
        %v454 = vpop.permute.xlu0 %453
        %455 = vrot.lane.b32.xlu0 %v450, 17
        %v456 = vpop.permute.xlu0 %455
        %vm457 = vcmp.lt.s32.totalorder %v389, 17
        %v458 = vsel %vm457, %v454, %v456
        %v459 = vsel %vm457, %v456, %v454
        %vm460 = vmand %vm419, %vm415
        %vm461 = vmand %vm420, %vm416
        %v462 = vsel %vm460, %v459, 0.0
        %v463 = vsel %vm461, %v458, 0.0
        %464 = vset.pattern.permute.xlu0 0
        %465 = vperm.xlu0 %464, %v387
        %v466 = vpop.permute.xlu0 %465
        %v468 = vmul.f32 %v462, %v466
        %v469 = vmul.f32 %v463, %v466
        %v470 = vadd.f32 %v445, %v468
        %v471 = vadd.f32 %v446, %v469
        %472 = vst [vmem:[#allocation1] ss:$2 sm:$0xff] %v386
        %v473 = vld.sshfl [vmem:[#allocation1] sm:$0xff pattern:$0x75316420]
        %v474 = vld.sshfl [vmem:[#allocation1 + $0x8] sm:$0xff pattern:$0x75316420]
        %477 = vrot.lane.b32.xlu0 %v473, 16
        %v478 = vpop.permute.xlu0 %477
        %479 = vrot.lane.b32.xlu0 %v474, 16
        %v480 = vpop.permute.xlu0 %479
        %vm481 = vcmp.lt.s32.totalorder %v389, 16
        %v482 = vsel %vm481, %v478, %v480
        %v483 = vsel %vm481, %v480, %v478
        %v484 = vsel %vm419, %v483, 0.0
        %v485 = vsel %vm420, %v482, 0.0
        %486 = vset.pattern.permute.xlu0 1
        %487 = vperm.xlu0 %486, %v387
        %v488 = vpop.permute.xlu0 %487
        %v490 = vmul.f32 %v484, %v488
        %v491 = vmul.f32 %v485, %v488
        %v492 = vadd.f32 %v470, %v490
        %v493 = vadd.f32 %v471, %v491
        %494 = vst [vmem:[#allocation1] ss:$2 sm:$0xff] %v386
        %v495 = vld.sshfl [vmem:[#allocation1] sm:$0xff pattern:$0x75316420]
        %v496 = vld.sshfl [vmem:[#allocation1 + $0x8] sm:$0xff pattern:$0x75316420]
        %499 = vrot.lane.b32.xlu0 %v495, 15
        %v500 = vpop.permute.xlu0 %499
        %501 = vrot.lane.b32.xlu0 %v496, 15
        %v502 = vpop.permute.xlu0 %501
        %vm503 = vcmp.lt.s32.totalorder %v389, 15
        %v504 = vsel %vm503, %v500, %v502
        %v505 = vsel %vm503, %v502, %v500
        %vm506 = vmand %vm419, %vm417
        %vm507 = vmand %vm420, %vm418
        %v508 = vsel %vm506, %v505, 0.0
        %v509 = vsel %vm507, %v504, 0.0
        %510 = vset.pattern.permute.xlu0 2
        %511 = vperm.xlu0 %510, %v387
        %v512 = vpop.permute.xlu0 %511
        %v514 = vmul.f32 %v508, %v512
        %v515 = vmul.f32 %v509, %v512
        %v516 = vadd.f32 %v492, %v514
        %v517 = vadd.f32 %v493, %v515
        %518 = vst [vmem:[#allocation1] ss:$2 sm:$0xff] %v386
        %v519 = vld.sshfl [vmem:[#allocation1] sm:$0xff pattern:$0x75316420]
        %v520 = vld.sshfl [vmem:[#allocation1 + $0x8] sm:$0xff pattern:$0x75316420]
        %523 = vrot.lane.b32.xlu0 %v519, 1
        %v524 = vpop.permute.xlu0 %523
        %525 = vrot.lane.b32.xlu0 %v520, 1
        %v526 = vpop.permute.xlu0 %525
        %vm527 = vcmp.lt.s32.totalorder %v389, 1
        %v528 = vsel %vm527, %v524, %v526
        %v529 = vsel %vm527, %v526, %v524
        %v530 = vsel %vm415, %v529, 0.0
        %v531 = vsel %vm416, %v528, 0.0
        %532 = vset.pattern.permute.xlu0 3
        %533 = vperm.xlu0 %532, %v387
        %v534 = vpop.permute.xlu0 %533
        %v536 = vmul.f32 %v530, %v534
        %v537 = vmul.f32 %v531, %v534
        %v538 = vadd.f32 %v516, %v536
        %v539 = vadd.f32 %v517, %v537
        %540 = vst [vmem:[#allocation1] ss:$2 sm:$0xff] %v386
        %v541 = vld.sshfl [vmem:[#allocation1] sm:$0xff pattern:$0x75316420]
        %v542 = vld.sshfl [vmem:[#allocation1 + $0x8] sm:$0xff pattern:$0x75316420]
        %545 = vrot.lane.b32.xlu0 %v541, 127
        %v546 = vpop.permute.xlu0 %545
        %547 = vrot.lane.b32.xlu0 %v542, 127
        %v548 = vpop.permute.xlu0 %547
        %vm549 = vcmp.lt.s32.totalorder %v389, 127
        %v550 = vsel %vm549, %v546, %v548
        %v551 = vsel %vm549, %v548, %v546
        %v552 = vsel %vm417, %v550, 0.0
        %v553 = vsel %vm418, %v551, 0.0
        %554 = vset.pattern.permute.xlu0 5
        %555 = vperm.xlu0 %554, %v387
        %v556 = vpop.permute.xlu0 %555
        %v558 = vmul.f32 %v552, %v556
        %v559 = vmul.f32 %v553, %v556
        %v560 = vadd.f32 %v538, %v558
        %v561 = vadd.f32 %v539, %v559
        %562 = vst [vmem:[#allocation1] ss:$2 sm:$0xff] %v386
        %v563 = vld.sshfl [vmem:[#allocation1] sm:$0xff pattern:$0x75316420]
        %v564 = vld.sshfl [vmem:[#allocation1 + $0x8] sm:$0xff pattern:$0x75316420]
        %567 = vrot.lane.b32.xlu0 %v563, 113
        %v568 = vpop.permute.xlu0 %567
        %569 = vrot.lane.b32.xlu0 %v564, 113
        %v570 = vpop.permute.xlu0 %569
        %vm571 = vcmp.lt.s32.totalorder %v389, 113
        %v572 = vsel %vm571, %v568, %v570
        %v573 = vsel %vm571, %v570, %v568
        %vm574 = vmand %vm421, %vm415
        %vm575 = vmand %vm422, %vm416
        %v576 = vsel %vm574, %v572, 0.0
        %v577 = vsel %vm575, %v573, 0.0
        %578 = vset.pattern.permute.xlu0 6
        %579 = vperm.xlu0 %578, %v387
        %v580 = vpop.permute.xlu0 %579
        %v582 = vmul.f32 %v576, %v580
        %v583 = vmul.f32 %v577, %v580
        %v584 = vadd.f32 %v560, %v582
        %v585 = vadd.f32 %v561, %v583
        %586 = vst [vmem:[#allocation1] ss:$2 sm:$0xff] %v386
        %v587 = vld.sshfl [vmem:[#allocation1] sm:$0xff pattern:$0x75316420]
        %v588 = vld.sshfl [vmem:[#allocation1 + $0x8] sm:$0xff pattern:$0x75316420]
        %591 = vrot.lane.b32.xlu0 %v587, 112
        %v592 = vpop.permute.xlu0 %591
        %593 = vrot.lane.b32.xlu0 %v588, 112
        %v594 = vpop.permute.xlu0 %593
        %vm595 = vcmp.lt.s32.totalorder %v389, 112
        %v596 = vsel %vm595, %v592, %v594
        %v597 = vsel %vm595, %v594, %v592
        %v598 = vsel %vm421, %v596, 0.0
        %v599 = vsel %vm422, %v597, 0.0
        %600 = vset.pattern.permute.xlu0 7
        %601 = vperm.xlu0 %600, %v387
        %v602 = vpop.permute.xlu0 %601
        %v604 = vmul.f32 %v598, %v602
        %v605 = vmul.f32 %v599, %v602
        %v606 = vadd.f32 %v584, %v604
        %v607 = vadd.f32 %v585, %v605
        %608 = vst [vmem:[#allocation1] ss:$2 sm:$0xff] %v386
        %v609 = vld.sshfl [vmem:[#allocation1] sm:$0xff pattern:$0x75316420]
        %v610 = vld.sshfl [vmem:[#allocation1 + $0x8] sm:$0xff pattern:$0x75316420]
        %613 = vrot.lane.b32.xlu0 %v609, 111
        %v614 = vpop.permute.xlu0 %613
        %615 = vrot.lane.b32.xlu0 %v610, 111
        %v616 = vpop.permute.xlu0 %615
        %vm617 = vcmp.lt.s32.totalorder %v389, 111
        %v618 = vsel %vm617, %v614, %v616
        %v619 = vsel %vm617, %v616, %v614
        %vm620 = vmand %vm421, %vm417
        %vm621 = vmand %vm422, %vm418
        %v622 = vsel %vm620, %v618, 0.0
        %v623 = vsel %vm621, %v619, 0.0
        %624 = vset.pattern.permute.xlu0 8
        %625 = vperm.xlu0 %624, %v387
        %v626 = vpop.permute.xlu0 %625
        %v628 = vmul.f32 %v622, %v626
        %v629 = vmul.f32 %v623, %v626
        %v630 = vadd.f32 %v606, %v628
        %v631 = vadd.f32 %v607, %v629
        %v632 = vld [vmem:[%s3] sm:$0xff]
        %v633 = vld [vmem:[%s4] sm:$0xff]
        %v634 = vperm.slane %v630, 0
        %v635 = vperm.slane %v631, 0
        %637 = vset.pattern.permute.xlu0 0
        %638 = vperm.xlu0 %637, %v632
        %v639 = vpop.permute.xlu0 %638
        %v641 = vmul.f32 %v634, %v639
        %v642 = vmul.f32 %v635, %v639
        %644 = vset.pattern.permute.xlu0 0
        %645 = vperm.xlu0 %644, %v633
        %v646 = vpop.permute.xlu0 %645
        %v648 = vadd.f32 %v646, %v641
        %v649 = vadd.f32 %v646, %v642
        %v650 = vperm.slane %v630, 1
        %v651 = vperm.slane %v631, 1
        %652 = vset.pattern.permute.xlu0 1
        %653 = vperm.xlu0 %652, %v632
        %v654 = vpop.permute.xlu0 %653
        %v656 = vmul.f32 %v650, %v654
        %v657 = vmul.f32 %v651, %v654
        %v658 = vadd.f32 %v648, %v656
        %v659 = vadd.f32 %v649, %v657
        %v660 = vperm.slane %v630, 2
        %v661 = vperm.slane %v631, 2
        %662 = vset.pattern.permute.xlu0 2
        %663 = vperm.xlu0 %662, %v632
        %v664 = vpop.permute.xlu0 %663
        %v666 = vmul.f32 %v660, %v664
        %v667 = vmul.f32 %v661, %v664
        %v668 = vadd.f32 %v658, %v666
        %v669 = vadd.f32 %v659, %v667
        %v670 = vperm.slane %v630, 3
        %v671 = vperm.slane %v631, 3
        %672 = vset.pattern.permute.xlu0 3
        %673 = vperm.xlu0 %672, %v632
        %v674 = vpop.permute.xlu0 %673
        %v676 = vmul.f32 %v670, %v674
        %v677 = vmul.f32 %v671, %v674
        %v678 = vadd.f32 %v668, %v676
        %v679 = vadd.f32 %v669, %v677
        %v680 = vmax.f32 %v678, 0.0
        %v681 = vmax.f32 %v679, 0.0
        %v682 = vld [vmem:[%s5] sm:$0xff]
        %v683 = vld [vmem:[%s6] sm:$0xff]
        %685 = vset.pattern.permute.xlu0 4
        %686 = vperm.xlu0 %685, %v682
        %v687 = vpop.permute.xlu0 %686
        %v689 = vmul.f32 %v680, %v687
        %v690 = vmul.f32 %v681, %v687
        %692 = vset.pattern.permute.xlu0 0
        %693 = vperm.xlu0 %692, %v683
        %v694 = vpop.permute.xlu0 %693
        %v696 = vadd.f32 %v694, %v689
        %v697 = vadd.f32 %v694, %v690
        %698 = vrot.lane.b32.xlu0 %v680, 17
        %v699 = vpop.permute.xlu0 %698
        %700 = vrot.lane.b32.xlu0 %v681, 17
        %v701 = vpop.permute.xlu0 %700
        %v702 = vsel %vm457, %v699, %v701
        %v703 = vsel %vm457, %v701, %v699
        %v704 = vsel %vm460, %v703, 0.0
        %v705 = vsel %vm461, %v702, 0.0
        %706 = vset.pattern.permute.xlu0 0
        %707 = vperm.xlu0 %706, %v682
        %v708 = vpop.permute.xlu0 %707
        %v710 = vmul.f32 %v704, %v708
        %v711 = vmul.f32 %v705, %v708
        %v712 = vadd.f32 %v696, %v710
        %v713 = vadd.f32 %v697, %v711
        %714 = vrot.lane.b32.xlu0 %v680, 16
        %v715 = vpop.permute.xlu0 %714
        %716 = vrot.lane.b32.xlu0 %v681, 16
        %v717 = vpop.permute.xlu0 %716
        %v718 = vsel %vm481, %v715, %v717
        %v719 = vsel %vm481, %v717, %v715
        %v720 = vsel %vm419, %v719, 0.0
        %v721 = vsel %vm420, %v718, 0.0
        %722 = vset.pattern.permute.xlu0 1
        %723 = vperm.xlu0 %722, %v682
        %v724 = vpop.permute.xlu0 %723
        %v726 = vmul.f32 %v720, %v724
        %v727 = vmul.f32 %v721, %v724
        %v728 = vadd.f32 %v712, %v726
        %v729 = vadd.f32 %v713, %v727
        %730 = vrot.lane.b32.xlu0 %v680, 15
        %v731 = vpop.permute.xlu0 %730
        %732 = vrot.lane.b32.xlu0 %v681, 15
        %v733 = vpop.permute.xlu0 %732
        %v734 = vsel %vm503, %v731, %v733
        %v735 = vsel %vm503, %v733, %v731
        %v736 = vsel %vm506, %v735, 0.0
        %v737 = vsel %vm507, %v734, 0.0
        %738 = vset.pattern.permute.xlu0 2
        %739 = vperm.xlu0 %738, %v682
        %v740 = vpop.permute.xlu0 %739
        %v742 = vmul.f32 %v736, %v740
        %v743 = vmul.f32 %v737, %v740
        %v744 = vadd.f32 %v728, %v742
        %v745 = vadd.f32 %v729, %v743
        %746 = vrot.lane.b32.xlu0 %v680, 1
        %v747 = vpop.permute.xlu0 %746
        %748 = vrot.lane.b32.xlu0 %v681, 1
        %v749 = vpop.permute.xlu0 %748
        %v750 = vsel %vm527, %v747, %v749
        %v751 = vsel %vm527, %v749, %v747
        %v752 = vsel %vm415, %v751, 0.0
        %v753 = vsel %vm416, %v750, 0.0
        %754 = vset.pattern.permute.xlu0 3
        %755 = vperm.xlu0 %754, %v682
        %v756 = vpop.permute.xlu0 %755
        %v758 = vmul.f32 %v752, %v756
        %v759 = vmul.f32 %v753, %v756
        %v760 = vadd.f32 %v744, %v758
        %v761 = vadd.f32 %v745, %v759
        %762 = vrot.lane.b32.xlu0 %v680, 127
        %v763 = vpop.permute.xlu0 %762
        %764 = vrot.lane.b32.xlu0 %v681, 127
        %v765 = vpop.permute.xlu0 %764
        %v766 = vsel %vm549, %v763, %v765
        %v767 = vsel %vm549, %v765, %v763
        %v768 = vsel %vm417, %v766, 0.0
        %v769 = vsel %vm418, %v767, 0.0
        %770 = vset.pattern.permute.xlu0 5
        %771 = vperm.xlu0 %770, %v682
        %v772 = vpop.permute.xlu0 %771
        %v774 = vmul.f32 %v768, %v772
        %v775 = vmul.f32 %v769, %v772
        %v776 = vadd.f32 %v760, %v774
        %v777 = vadd.f32 %v761, %v775
        %778 = vrot.lane.b32.xlu0 %v680, 113
        %v779 = vpop.permute.xlu0 %778
        %780 = vrot.lane.b32.xlu0 %v681, 113
        %v781 = vpop.permute.xlu0 %780
        %v782 = vsel %vm571, %v779, %v781
        %v783 = vsel %vm571, %v781, %v779
        %v784 = vsel %vm574, %v782, 0.0
        %v785 = vsel %vm575, %v783, 0.0
        %786 = vset.pattern.permute.xlu0 6
        %787 = vperm.xlu0 %786, %v682
        %v788 = vpop.permute.xlu0 %787
        %v790 = vmul.f32 %v784, %v788
        %v791 = vmul.f32 %v785, %v788
        %v792 = vadd.f32 %v776, %v790
        %v793 = vadd.f32 %v777, %v791
        %794 = vrot.lane.b32.xlu0 %v680, 112
        %v795 = vpop.permute.xlu0 %794
        %796 = vrot.lane.b32.xlu0 %v681, 112
        %v797 = vpop.permute.xlu0 %796
        %v798 = vsel %vm595, %v795, %v797
        %v799 = vsel %vm595, %v797, %v795
        %v800 = vsel %vm421, %v798, 0.0
        %v801 = vsel %vm422, %v799, 0.0
        %802 = vset.pattern.permute.xlu0 7
        %803 = vperm.xlu0 %802, %v682
        %v804 = vpop.permute.xlu0 %803
        %v806 = vmul.f32 %v800, %v804
        %v807 = vmul.f32 %v801, %v804
        %v808 = vadd.f32 %v792, %v806
        %v809 = vadd.f32 %v793, %v807
        %810 = vrot.lane.b32.xlu0 %v680, 111
        %v811 = vpop.permute.xlu0 %810
        %812 = vrot.lane.b32.xlu0 %v681, 111
        %v813 = vpop.permute.xlu0 %812
        %v814 = vsel %vm617, %v811, %v813
        %v815 = vsel %vm617, %v813, %v811
        %v816 = vsel %vm620, %v814, 0.0
        %v817 = vsel %vm621, %v815, 0.0
        %818 = vset.pattern.permute.xlu0 8
        %819 = vperm.xlu0 %818, %v682
        %v820 = vpop.permute.xlu0 %819
        %v822 = vmul.f32 %v816, %v820
        %v823 = vmul.f32 %v817, %v820
        %v824 = vadd.f32 %v808, %v822
        %v825 = vadd.f32 %v809, %v823
        %v826 = vld [vmem:[%s7] sm:$0xff]
        %v827 = vld [vmem:[%s8] sm:$0xff]
        %v828 = vperm.slane %v824, 0
        %v829 = vperm.slane %v825, 0
        %831 = vset.pattern.permute.xlu0 0
        %832 = vperm.xlu0 %831, %v826
        %v833 = vpop.permute.xlu0 %832
        %v835 = vmul.f32 %v828, %v833
        %v836 = vmul.f32 %v829, %v833
        %838 = vset.pattern.permute.xlu0 0
        %839 = vperm.xlu0 %838, %v827
        %v840 = vpop.permute.xlu0 %839
        %v842 = vadd.f32 %v840, %v835
        %v843 = vadd.f32 %v840, %v836
        %v844 = vperm.slane %v824, 1
        %v845 = vperm.slane %v825, 1
        %846 = vset.pattern.permute.xlu0 1
        %847 = vperm.xlu0 %846, %v826
        %v848 = vpop.permute.xlu0 %847
        %v850 = vmul.f32 %v844, %v848
        %v851 = vmul.f32 %v845, %v848
        %v852 = vadd.f32 %v842, %v850
        %v853 = vadd.f32 %v843, %v851
        %v854 = vperm.slane %v824, 2
        %v855 = vperm.slane %v825, 2
        %856 = vset.pattern.permute.xlu0 2
        %857 = vperm.xlu0 %856, %v826
        %v858 = vpop.permute.xlu0 %857
        %v860 = vmul.f32 %v854, %v858
        %v861 = vmul.f32 %v855, %v858
        %v862 = vadd.f32 %v852, %v860
        %v863 = vadd.f32 %v853, %v861
        %v864 = vperm.slane %v824, 3
        %v865 = vperm.slane %v825, 3
        %866 = vset.pattern.permute.xlu0 3
        %867 = vperm.xlu0 %866, %v826
        %v868 = vpop.permute.xlu0 %867
        %v870 = vmul.f32 %v864, %v868
        %v871 = vmul.f32 %v865, %v868
        %v872 = vadd.f32 %v862, %v870
        %v873 = vadd.f32 %v863, %v871
        %v874 = vperm.slane %v824, 4
        %v875 = vperm.slane %v825, 4
        %876 = vset.pattern.permute.xlu0 4
        %877 = vperm.xlu0 %876, %v826
        %v878 = vpop.permute.xlu0 %877
        %v880 = vmul.f32 %v874, %v878
        %v881 = vmul.f32 %v875, %v878
        %v882 = vadd.f32 %v872, %v880
        %v883 = vadd.f32 %v873, %v881
        %v884 = vperm.slane %v824, 5
        %v885 = vperm.slane %v825, 5
        %886 = vset.pattern.permute.xlu0 5
        %887 = vperm.xlu0 %886, %v826
        %v888 = vpop.permute.xlu0 %887
        %v890 = vmul.f32 %v884, %v888
        %v891 = vmul.f32 %v885, %v888
        %v892 = vadd.f32 %v882, %v890
        %v893 = vadd.f32 %v883, %v891
        %v894 = vperm.slane %v824, 6
        %v895 = vperm.slane %v825, 6
        %896 = vset.pattern.permute.xlu0 6
        %897 = vperm.xlu0 %896, %v826
        %v898 = vpop.permute.xlu0 %897
        %v900 = vmul.f32 %v894, %v898
        %v901 = vmul.f32 %v895, %v898
        %v902 = vadd.f32 %v892, %v900
        %v903 = vadd.f32 %v893, %v901
        %v904 = vperm.slane %v824, 7
        %v905 = vperm.slane %v825, 7
        %906 = vset.pattern.permute.xlu0 7
        %907 = vperm.xlu0 %906, %v826
        %v908 = vpop.permute.xlu0 %907
        %v910 = vmul.f32 %v904, %v908
        %v911 = vmul.f32 %v905, %v908
        %v912 = vadd.f32 %v902, %v910
        %v913 = vadd.f32 %v903, %v911
        %v914 = vld [vmem:[%s9] sm:$0xff]
        %v915 = vld [vmem:[%s10] sm:$0xff]
        %v917 = vperm.slane %v385, 0
        %v918 = vperm.slane %v385, 4
        %v921 = vperm.slane %v917, 0
        %v922 = vperm.slane %v918, 0
        %924 = vset.pattern.permute.xlu0 0
        %925 = vperm.xlu0 %924, %v914
        %v926 = vpop.permute.xlu0 %925
        %v928 = vmul.f32 %v921, %v926
        %v929 = vmul.f32 %v922, %v926
        %931 = vset.pattern.permute.xlu0 0
        %932 = vperm.xlu0 %931, %v915
        %v933 = vpop.permute.xlu0 %932
        %v935 = vadd.f32 %v933, %v928
        %v936 = vadd.f32 %v933, %v929
        %v937 = vperm.slane %v385, 1
        %v938 = vperm.slane %v385, 5
        %v941 = vperm.slane %v937, 1
        %v942 = vperm.slane %v938, 1
        %943 = vset.pattern.permute.xlu0 1
        %944 = vperm.xlu0 %943, %v914
        %v945 = vpop.permute.xlu0 %944
        %v947 = vmul.f32 %v941, %v945
        %v948 = vmul.f32 %v942, %v945
        %v949 = vadd.f32 %v935, %v947
        %v950 = vadd.f32 %v936, %v948
        %v951 = vperm.slane %v385, 2
        %v952 = vperm.slane %v385, 6
        %v955 = vperm.slane %v951, 2
        %v956 = vperm.slane %v952, 2
        %957 = vset.pattern.permute.xlu0 2
        %958 = vperm.xlu0 %957, %v914
        %v959 = vpop.permute.xlu0 %958
        %v961 = vmul.f32 %v955, %v959
        %v962 = vmul.f32 %v956, %v959
        %v963 = vadd.f32 %v949, %v961
        %v964 = vadd.f32 %v950, %v962
        %v965 = vperm.slane %v385, 3
        %v966 = vperm.slane %v385, 7
        %v969 = vperm.slane %v965, 3
        %v970 = vperm.slane %v966, 3
        %971 = vset.pattern.permute.xlu0 3
        %972 = vperm.xlu0 %971, %v914
        %v973 = vpop.permute.xlu0 %972
        %v975 = vmul.f32 %v969, %v973
        %v976 = vmul.f32 %v970, %v973
        %v977 = vadd.f32 %v963, %v975
        %v978 = vadd.f32 %v964, %v976
        %v979 = vadd.f32 %v912, %v977
        %v980 = vadd.f32 %v913, %v978
        %981 = vst [vmem:[%s379] sm:$0xff] %v979
        %982 = vst [vmem:[%s379 + $0x8] sm:$0xff] %v980
        %s983 = sand.u32 %s269, 1
        %s984 = scalar_lea.sflag [#allocation3], %s983
        %s985 = sand.u32 %s269, 1
        %s986 = smul.addr %s985, 16
        %s987 = scalar_lea.vmem [#allocation2], %s986
        // Predicated region
        $region65: #{tpu_custom_call.1} parent=63 // pred_check
          %p988 = pneg %p279
        $region66: #{tpu_custom_call.1} parent=63 // pred_check_branch
          %990 = sbr.rel (%p988) target = $region68
        $region67: #{tpu_custom_call.1} parent=63 // pred_region
          %992 = vsyncadd %s984, 0
          %s993 = smul.addr %s25, 2
          %s994 = smul.addr %s993, 8
          %s995 = scalar_lea.hbm %s11, %s994
          %s997 = sshll.u32 %s987, 4
          %s998 = int_to_ptr.vmem [resolvable:$true] %s997
          %s999 = sshll.u32 %s995, 4
          %s1000 = int_to_ptr.hbm [resolvable:$true] %s999
          %1002 = dma.vmem_to_hbm [thread:$0]  %s998, 256, %s1000, %s984
        $region68: #{tpu_custom_call.1} parent=63 // pred_fallthru
          _
      $region64: #{tpu_custom_call.1} parent=5 // pred_fallthru
        _
      %p1003 = scmp.le.s32.totalorder 2, %s20
      // Predicated region
      $region69: #{tpu_custom_call.1} parent=5 // pred_check
        %p1004 = pneg %p1003
      $region70: #{tpu_custom_call.1} parent=5 // pred_check_branch
        %1006 = sbr.rel (%p1004) target = $region72
      $region71: #{tpu_custom_call.1} parent=5 // pred_region
        %s1007 = ssub.s32 %s20, 2
        // Predicated region
        $region73: #{tpu_custom_call.1} parent=71 // pred_check
          %p1008 = pneg %p285
        $region74: #{tpu_custom_call.1} parent=71 // pred_check_branch
          %1010 = sbr.rel (%p1008) target = $region76
        $region75: #{tpu_custom_call.1} parent=71 // pred_region
          %s1011 = sand.u32 %s270, 1
          %s1012 = scalar_lea.sflag [#allocation3], %s1011
          %s1013 = sand.u32 %s270, 1
          %s1014 = smul.addr %s1013, 16
          %s1015 = scalar_lea.vmem [#allocation2], %s1014
          %1017 = dma.done %s1012, 256
        $region76: #{tpu_custom_call.1} parent=71 // pred_fallthru
          _
      $region72: #{tpu_custom_call.1} parent=5 // pred_fallthru
        _
    $region6: #{tpu_custom_call.1} parent=1 // loop_footer
      %s24 = sadd.s32 1, %s20
    $region7: #{tpu_custom_call.1} parent=1 // loop_footer_branch
      %19 = sbr.rel target = $region3
    $region8: #{tpu_custom_call.1} parent=1 // loop_exit
      _
    %1018 = vsyncpa [#allocation3], 1
    %s1019 = scalar_lea.sflag [#allocation3], 1
    %1020 = vsyncpa %s1019, 1

</llo_original>
